<compile_context>
chip_gen: v7x
topology: tpu7x:2x2x1
jax: 0.10.0
libtpu: 0.0.40
codegen_flags: <defaults>
</compile_context>

<pallas_src>
import functools

import jax
import jax.numpy as jnp
import numpy as np
from jax.experimental import pallas as pl
from jax.experimental.pallas import tpu as pltpu

EPS = 1e-5


# ---------------------------------------------------------------------------
# Fused kernel: 3x3 conv (single im2col matmul) + folded BN1 + ReLU, pooled-sum
# accumulation across H tiles, then (at the last tile) attention + in-VMEM rescale.
# ---------------------------------------------------------------------------
def _arm_fused_kernel(x_ref, top_ref, bot_ref, w_ref, s1_ref, b1_ref,
                      wa_ref, s2_ref, b2_ref, out_ref, pool_ref):
    """
    x_ref   : (1, tile_h, W, Cin) bf16   rows [t*tile_h, (t+1)*tile_h) of the UNPADDED input
    top_ref : (1, 1, W, Cin)      bf16   row t*tile_h - 1 (clamped; zeroed in-kernel at t == 0)
    bot_ref : (1, 1, W, Cin)      bf16   row (t+1)*tile_h (clamped; zeroed at t == last)
    w_ref   : (9*Cin, Cout)       bf16   3x3 weights, tap-major along K
    s1_ref  : (1, Cout) f32  folded BN1 scale     b1_ref: (1, Cout) f32  folded BN1 bias
    wa_ref  : (Cout, Cout) f32   1x1 attention weight [out, in], pre-scaled by 1/(H*W)
    s2_ref  : (Cout, 1) f32  folded BN2 scale     b2_ref: (Cout, 1) f32  folded BN2 bias
    out_ref : (1, Cout, H*W) f32  VMEM-resident per-sample slab (NCHW order); written per tile,
                                  rescaled by the attention vector at the last tile
    pool_ref: (1, Cout) f32  per-sample channel-sum accumulator (VMEM scratch)
    """
    _, tile_h, W, cin = x_ref.shape
    M = tile_h * W
    t = pl.program_id(1)
    n_t = pl.num_programs(1)

    @pl.when(t == 0)
    def _():
        pool_ref[...] = jnp.zeros_like(pool_ref)

    # --- assemble the zero-padded (tile_h+2, W+2, Cin) tile in bf16 (layout phase stays bf16) ---
    top_raw = top_ref[0]                                                   # (1, W, Cin)
    bot_raw = bot_ref[0]
    top = jnp.where(t == 0, jnp.zeros_like(top_raw), top_raw)              # zero halo at image top
    bot = jnp.where(t == n_t - 1, jnp.zeros_like(bot_raw), bot_raw)        # zero halo at image bottom
    tile = jnp.concatenate([top, x_ref[0], bot], axis=0)                   # (tile_h+2, W, Cin)
    zcol = jnp.zeros((tile_h + 2, 1, cin), dtype=tile.dtype)
    tile = jnp.concatenate([zcol, tile, zcol], axis=1)                     # (tile_h+2, W+2, Cin)

    # --- im2col -> ONE (M, 9*Cin) x (9*Cin, Cout) MXU matmul with f32 accumulation ---
    cols = []
    for dh in range(3):
        for dw in range(3):
            cols.append(tile[dh:dh + tile_h, dw:dw + W, :].reshape(M, cin))
    patch = jnp.concatenate(cols, axis=-1)                                 # (M, 9*Cin) bf16

    acc = jnp.dot(patch, w_ref[...], preferred_element_type=jnp.float32)   # (M, Cout) f32
    feat = jnp.maximum(acc * s1_ref[...] + b1_ref[...], 0.0)               # folded BN1 + ReLU

    # Global-average-pool numerator: sublane reduction into the lane-dense (1, Cout) accumulator.
    pool_ref[...] += jnp.sum(feat, axis=0, keepdims=True)

    # Channels-first store into the VMEM-resident output slab (minor dim = tile_h*W, lane-dense).
    off = t * M
    if M % 128 == 0:  # static
        off = pl.multiple_of(off, 128)
    out_ref[0, :, pl.ds(off, M)] = feat.T

    # --- last tile of this sample: attention vector + in-VMEM rescale (once per sample) ---
    @pl.when(t == n_t - 1)
    def _():
        # z[c] = sum_i wa[c, i]/(H*W) * pool_sum[i]   (elementwise mul + lane reduce, no relayout)
        z = jnp.sum(wa_ref[...] * pool_ref[...], axis=1, keepdims=True)    # (Cout, 1) f32
        z = z * s2_ref[...] + b2_ref[...]                                  # folded BN2
        atten = 1.0 / (1.0 + jnp.exp(-z))                                  # sigmoid, (Cout, 1)
        out_ref[0] = out_ref[0] * atten


# ---------------------------------------------------------------------------
# Wrapper helpers
# ---------------------------------------------------------------------------
def _fold_bn(gamma, beta, mean, var):
    scale = gamma / jnp.sqrt(var + EPS)
    bias = beta - mean * scale
    return scale.astype(jnp.float32), bias.astype(jnp.float32)


def _vmem_estimate(tile_h, W, Cin, Cout, HW):
    """Rough per-step VMEM working set (accounts for 128-lane padding of small minor dims)."""
    bf16, f32 = 2, 4
    cin_l = max(Cin, 128)
    cout_l = max(Cout, 128)
    k_l = max(9 * Cin, 128)
    x_blk = (tile_h + 2) * W * cin_l * bf16            # main + 2 halo rows
    w_blk = 9 * Cin * cout_l * bf16
    params = (4 * cout_l + Cout * cout_l) * f32
    out_blk = Cout * max(HW, 128) * f32                # resident per-sample slab
    patch = tile_h * W * (cin_l + k_l) * bf16          # padded tile + im2col patch
    feat = tile_h * W * cout_l * f32                   # accumulator / feat / transpose
    return 2 * (x_blk + w_blk + params) + out_blk + 2 * (patch + feat)


def _pick_tile_h(H, W, Cin, Cout, budget_bytes=24 << 20):
    """Largest divisor of H whose working set fits the budget, preferring tile_h*W % 128 == 0."""
    HW = H * W
    best = None
    for th in range(H, 0, -1):
        if H % th:
            continue
        if _vmem_estimate(th, W, Cin, Cout, HW) > budget_bytes:
            continue
        if (th * W) % 128 == 0:
            return th
        if best is None:
            best = th
    return best if best is not None else 1


@functools.partial(jax.jit, static_argnames=("tile_h",))
def attention_refinement(x_nchw, w_conv, bn1, w_atten, bn2, tile_h=None):
    """x_nchw: (N, Cin, H, W); w_conv: (Cout, Cin, 3, 3) [OIHW]; w_atten: (Cout, Cout, 1, 1)."""
    N, Cin, H, W = x_nchw.shape
    Cout = w_conv.shape[0]
    HW = H * W

    if tile_h is None:
        tile_h = _pick_tile_h(H, W, Cin, Cout)
    if H % tile_h != 0:
        raise NotImplementedError("H must be divisible by tile_h")
    n_t = H // tile_h

    # NCHW -> NHWC + bf16 cast: a single fused XLA pass (spatial zero-padding is done in-kernel).
    x_nhwc = jnp.transpose(x_nchw, (0, 2, 3, 1)).astype(jnp.bfloat16)

    # 3x3 weights OIHW -> (kh*kw*Cin, Cout), tap-major along K (matches in-kernel im2col order).
    w9 = jnp.transpose(w_conv, (2, 3, 1, 0)).reshape(9 * Cin, Cout).astype(jnp.bfloat16)

    # 1x1 attention weight kept [out, in]; fold the 1/(H*W) of the average pool into it
    # (the kernel hands the attention step the channel SUM, not the mean).
    wa = (w_atten[:, :, 0, 0] / float(HW)).astype(jnp.float32)

    s1, b1 = _fold_bn(*bn1)
    s2, b2 = _fold_bn(*bn2)
    s1 = s1.reshape(1, Cout)
    b1 = b1.reshape(1, Cout)
    s2 = s2.reshape(Cout, 1)
    b2 = b2.reshape(Cout, 1)

    # Size the VMEM request to actual usage (with headroom), never the full 64 MiB of a v7x TC.
    est = _vmem_estimate(tile_h, W, Cin, Cout, HW)
    vmem_limit = int(min(max(4 * est, 8 << 20), 48 << 20))

    out = pl.pallas_call(
        _arm_fused_kernel,
        grid=(N, n_t),
        in_specs=[
            # main tile rows [t*tile_h, (t+1)*tile_h)
            pl.BlockSpec((1, tile_h, W, Cin), lambda n, t: (n, t, 0, 0)),
            # 1-row top halo: row t*tile_h - 1 (clamped to 0; zeroed in-kernel at t == 0)
            pl.BlockSpec((1, 1, W, Cin),
                         lambda n, t: (n, jnp.maximum(t * tile_h - 1, 0), 0, 0)),
            # 1-row bottom halo: row (t+1)*tile_h (clamped to H-1; zeroed in-kernel at t == last)
            pl.BlockSpec((1, 1, W, Cin),
                         lambda n, t: (n, jnp.minimum((t + 1) * tile_h, H - 1), 0, 0)),
            pl.BlockSpec((9 * Cin, Cout), lambda n, t: (0, 0)),
            pl.BlockSpec((1, Cout), lambda n, t: (0, 0)),
            pl.BlockSpec((1, Cout), lambda n, t: (0, 0)),
            pl.BlockSpec((Cout, Cout), lambda n, t: (0, 0)),
            pl.BlockSpec((Cout, 1), lambda n, t: (0, 0)),
            pl.BlockSpec((Cout, 1), lambda n, t: (0, 0)),
        ],
        # Same output block for every t of a sample -> VMEM-resident slab across the tile sweep.
        out_specs=pl.BlockSpec((1, Cout, HW), lambda n, t: (n, 0, 0)),
        out_shape=jax.ShapeDtypeStruct((N, Cout, HW), jnp.float32),
        scratch_shapes=[pltpu.VMEM((1, Cout), jnp.float32)],
        compiler_params=pltpu.CompilerParams(
            dimension_semantics=("parallel", "arbitrary"),
            vmem_limit_bytes=vmem_limit),
        cost_estimate=pl.CostEstimate(
            flops=2 * N * HW * 9 * Cin * Cout + N * (2 * Cout * Cout + 2 * Cout * HW),
            transcendentals=N * Cout,
            bytes_accessed=(N * HW * Cin * 2 + 9 * Cin * Cout * 2 + Cout * Cout * 4
                            + 4 * Cout * 4 + N * Cout * HW * 4)),
    )(x_nhwc, x_nhwc, x_nhwc, w9, s1, b1, wa, s2, b2)

    # (N, Cout, H*W) is already NCHW order -> metadata-only reshape, no transpose.
    return out.reshape(N, Cout, H, W)


# ---------------------------------------------------------------------------
# Pure-JAX reference (mirrors the PyTorch forward with BN in eval mode)
# ---------------------------------------------------------------------------
def reference(x_nchw, w_conv, bn1, w_atten, bn2):
    def bn(x, params):
        g, b, m, v = params
        inv = g / jnp.sqrt(v + EPS)
        return x * inv[None, :, None, None] + (b - m * inv)[None, :, None, None]

    feat = jax.lax.conv_general_dilated(
        x_nchw, w_conv, window_strides=(1, 1), padding=((1, 1), (1, 1)),
        dimension_numbers=('NCHW', 'OIHW', 'NCHW'),
        precision=jax.lax.Precision.HIGHEST)
    feat = jnp.maximum(bn(feat, bn1), 0.0)
    atten = jnp.mean(feat, axis=(2, 3), keepdims=True)
    atten = jax.lax.conv_general_dilated(
        atten, w_atten, window_strides=(1, 1), padding='VALID',
        dimension_numbers=('NCHW', 'OIHW', 'NCHW'),
        precision=jax.lax.Precision.HIGHEST)
    atten = jax.nn.sigmoid(bn(atten, bn2))
    return feat * atten


def _make_bn_params(key, c):
    k1, k2, k3, k4 = jax.random.split(key, 4)
    gamma = 1.0 + 0.1 * jax.random.normal(k1, (c,), jnp.float32)
    beta = 0.1 * jax.random.normal(k2, (c,), jnp.float32)
    mean = 0.1 * jax.random.normal(k3, (c,), jnp.float32)
    var = 0.5 + jax.random.uniform(k4, (c,), jnp.float32)
    return gamma, beta, mean, var


if __name__ == "__main__":
    N, Cin, Cout, H, W = 2, 8, 16, 16, 16

    key = jax.random.PRNGKey(0)
    kx, kw, kwa, kb1, kb2 = jax.random.split(key, 5)

    x = jax.random.normal(kx, (N, Cin, H, W), jnp.float32)

    # kaiming_normal_(a=1): std = sqrt(2 / ((1 + a^2) * fan_in)) = sqrt(1 / fan_in)
    w_conv = jax.random.normal(kw, (Cout, Cin, 3, 3), jnp.float32) * (1.0 / (Cin * 9)) ** 0.5
    w_atten = jax.random.normal(kwa, (Cout, Cout, 1, 1), jnp.float32) * (1.0 / Cout) ** 0.5

    bn1 = _make_bn_params(kb1, Cout)
    bn2 = _make_bn_params(kb2, Cout)

    out = attention_refinement(x, w_conv, bn1, w_atten, bn2)
    out = jax.block_until_ready(out)

    # The kernel's conv matmul uses bf16 operands (f32 accumulation); compare against an f32
    # reference fed the same bf16-rounded conv operands so the check isolates kernel correctness.
    x_r = x.astype(jnp.bfloat16).astype(jnp.float32)
    w_r = w_conv.astype(jnp.bfloat16).astype(jnp.float32)
    ref = reference(x_r, w_r, bn1, w_atten, bn2)
    np.testing.assert_allclose(np.asarray(out), np.asarray(ref), rtol=2e-3, atol=2e-3)

    print("KERNEL_OK")
</pallas_src>

<mosaic_0001>
module attributes {stable_mosaic.version = 11 : i64} {
  func.func @_arm_fused_kernel(%arg0: i32, %arg1: i32, %arg2: memref<1x16x16x8xbf16, #tpu.memory_space<vmem>>, %arg3: memref<1x1x16x8xbf16, #tpu.memory_space<vmem>>, %arg4: memref<1x1x16x8xbf16, #tpu.memory_space<vmem>>, %arg5: memref<72x16xbf16, #tpu.memory_space<vmem>>, %arg6: memref<1x16xf32, #tpu.memory_space<vmem>>, %arg7: memref<1x16xf32, #tpu.memory_space<vmem>>, %arg8: memref<16x16xf32, #tpu.memory_space<vmem>>, %arg9: memref<16x1xf32, #tpu.memory_space<vmem>>, %arg10: memref<16x1xf32, #tpu.memory_space<vmem>>, %arg11: memref<1x16x256xf32, #tpu.memory_space<vmem>>, %arg12: memref<1x16xf32, #tpu.memory_space<vmem>>) attributes {dimension_semantics = [#tpu.dimension_semantics<parallel>, #tpu.dimension_semantics<arbitrary>], iteration_bounds = array<i64: 2, 1>, scalar_prefetch = 0 : i64, scratch_operands = 1 : i64, tpu.core_type = #tpu.core_type<tc>, window_params = [{transform_indices = @transform_0, window_bounds = array<i64: 1, 16, 16, 8>}, {transform_indices = @transform_1, window_bounds = array<i64: 1, 1, 16, 8>}, {transform_indices = @transform_2, window_bounds = array<i64: 1, 1, 16, 8>}, {pipeline_mode = #tpu.pipeline_mode<synchronous>, transform_indices = @transform_3, window_bounds = array<i64: 72, 16>}, {pipeline_mode = #tpu.pipeline_mode<synchronous>, transform_indices = @transform_4, window_bounds = array<i64: 1, 16>}, {pipeline_mode = #tpu.pipeline_mode<synchronous>, transform_indices = @transform_5, window_bounds = array<i64: 1, 16>}, {pipeline_mode = #tpu.pipeline_mode<synchronous>, transform_indices = @transform_6, window_bounds = array<i64: 16, 16>}, {pipeline_mode = #tpu.pipeline_mode<synchronous>, transform_indices = @transform_7, window_bounds = array<i64: 16, 1>}, {pipeline_mode = #tpu.pipeline_mode<synchronous>, transform_indices = @transform_8, window_bounds = array<i64: 16, 1>}, {transform_indices = @transform_9, window_bounds = array<i64: 1, 16, 256>}]} {
    %c0_i32 = arith.constant 0 : i32
    %0 = arith.cmpi eq, %arg1, %c0_i32 : i32
    %1 = arith.extui %0 : i1 to i32
    %c0_i32_0 = arith.constant 0 : i32
    %2 = arith.cmpi ne, %1, %c0_i32_0 : i32
    scf.if %2 {
      %cst_33 = arith.constant 0.000000e+00 : f32
      %62 = vector.broadcast %cst_33 : f32 to vector<1x16xf32>
      %c0_34 = arith.constant 0 : index
      %c0_35 = arith.constant 0 : index
      %63 = vector.load %arg12[%c0_34, %c0_35] : memref<1x16xf32, #tpu.memory_space<vmem>>, vector<1x16xf32>
      tpu.vector_store %arg12[%c0_34, %c0_35], %62 {strides = array<i32>} : memref<1x16xf32, #tpu.memory_space<vmem>>, vector<1x16xf32>,
    } else {
    }
    %c0 = arith.constant 0 : index
    %c0_1 = arith.constant 0 : index
    %c0_2 = arith.constant 0 : index
    %c0_3 = arith.constant 0 : index
    %3 = vector.load %arg3[%c0, %c0_1, %c0_2, %c0_3] : memref<1x1x16x8xbf16, #tpu.memory_space<vmem>>, vector<1x1x16x8xbf16>
    %4 = vector.shape_cast %3 : vector<1x1x16x8xbf16> to vector<1x16x8xbf16>
    %c0_4 = arith.constant 0 : index
    %c0_5 = arith.constant 0 : index
    %c0_6 = arith.constant 0 : index
    %c0_7 = arith.constant 0 : index
    %5 = vector.load %arg4[%c0_4, %c0_5, %c0_6, %c0_7] : memref<1x1x16x8xbf16, #tpu.memory_space<vmem>>, vector<1x1x16x8xbf16>
    %6 = vector.shape_cast %5 : vector<1x1x16x8xbf16> to vector<1x16x8xbf16>
    %c0_i32_8 = arith.constant 0 : i32
    %7 = arith.cmpi eq, %arg1, %c0_i32_8 : i32
    %cst = arith.constant 0.000000e+00 : bf16
    %8 = vector.broadcast %cst : bf16 to vector<1x16x8xbf16>
    %9 = arith.select %7, %8, %4 : vector<1x16x8xbf16>
    %c0_i32_9 = arith.constant 0 : i32
    %10 = arith.cmpi eq, %arg1, %c0_i32_9 : i32
    %cst_10 = arith.constant 0.000000e+00 : bf16
    %11 = vector.broadcast %cst_10 : bf16 to vector<1x16x8xbf16>
    %12 = arith.select %10, %11, %6 : vector<1x16x8xbf16>
    %c0_11 = arith.constant 0 : index
    %c0_12 = arith.constant 0 : index
    %c0_13 = arith.constant 0 : index
    %c0_14 = arith.constant 0 : index
    %13 = vector.load %arg2[%c0_11, %c0_12, %c0_13, %c0_14] : memref<1x16x16x8xbf16, #tpu.memory_space<vmem>>, vector<1x16x16x8xbf16>
    %14 = vector.shape_cast %13 : vector<1x16x16x8xbf16> to vector<16x16x8xbf16>
    %15 = tpu.concatenate %9, %14, %12 in 0 : vector<1x16x8xbf16>, vector<16x16x8xbf16>, vector<1x16x8xbf16> -> vector<18x16x8xbf16>
    %cst_15 = arith.constant 0.000000e+00 : bf16
    %16 = vector.broadcast %cst_15 : bf16 to vector<18x1x8xbf16>
    %17 = tpu.concatenate %16, %15, %16 in 1 : vector<18x1x8xbf16>, vector<18x16x8xbf16>, vector<18x1x8xbf16> -> vector<18x18x8xbf16>
    %18 = vector.extract_strided_slice %17 {offsets = [0, 0, 0], sizes = [16, 16, 8], strides = [1, 1, 1]} : vector<18x18x8xbf16> to vector<16x16x8xbf16>
    %19 = vector.shape_cast %18 : vector<16x16x8xbf16> to vector<256x8xbf16>
    %20 = vector.extract_strided_slice %17 {offsets = [0, 1, 0], sizes = [16, 16, 8], strides = [1, 1, 1]} : vector<18x18x8xbf16> to vector<16x16x8xbf16>
    %21 = vector.shape_cast %20 : vector<16x16x8xbf16> to vector<256x8xbf16>
    %22 = vector.extract_strided_slice %17 {offsets = [0, 2, 0], sizes = [16, 16, 8], strides = [1, 1, 1]} : vector<18x18x8xbf16> to vector<16x16x8xbf16>
    %23 = vector.shape_cast %22 : vector<16x16x8xbf16> to vector<256x8xbf16>
    %24 = vector.extract_strided_slice %17 {offsets = [1, 0, 0], sizes = [16, 16, 8], strides = [1, 1, 1]} : vector<18x18x8xbf16> to vector<16x16x8xbf16>
    %25 = vector.shape_cast %24 : vector<16x16x8xbf16> to vector<256x8xbf16>
    %26 = vector.extract_strided_slice %17 {offsets = [1, 1, 0], sizes = [16, 16, 8], strides = [1, 1, 1]} : vector<18x18x8xbf16> to vector<16x16x8xbf16>
    %27 = vector.shape_cast %26 : vector<16x16x8xbf16> to vector<256x8xbf16>
    %28 = vector.extract_strided_slice %17 {offsets = [1, 2, 0], sizes = [16, 16, 8], strides = [1, 1, 1]} : vector<18x18x8xbf16> to vector<16x16x8xbf16>
    %29 = vector.shape_cast %28 : vector<16x16x8xbf16> to vector<256x8xbf16>
    %30 = vector.extract_strided_slice %17 {offsets = [2, 0, 0], sizes = [16, 16, 8], strides = [1, 1, 1]} : vector<18x18x8xbf16> to vector<16x16x8xbf16>
    %31 = vector.shape_cast %30 : vector<16x16x8xbf16> to vector<256x8xbf16>
    %32 = vector.extract_strided_slice %17 {offsets = [2, 1, 0], sizes = [16, 16, 8], strides = [1, 1, 1]} : vector<18x18x8xbf16> to vector<16x16x8xbf16>
    %33 = vector.shape_cast %32 : vector<16x16x8xbf16> to vector<256x8xbf16>
    %34 = vector.extract_strided_slice %17 {offsets = [2, 2, 0], sizes = [16, 16, 8], strides = [1, 1, 1]} : vector<18x18x8xbf16> to vector<16x16x8xbf16>
    %35 = vector.shape_cast %34 : vector<16x16x8xbf16> to vector<256x8xbf16>
    %36 = tpu.concatenate %19, %21, %23, %25, %27, %29, %31, %33, %35 in 1 : vector<256x8xbf16>, vector<256x8xbf16>, vector<256x8xbf16>, vector<256x8xbf16>, vector<256x8xbf16>, vector<256x8xbf16>, vector<256x8xbf16>, vector<256x8xbf16>, vector<256x8xbf16> -> vector<256x72xbf16>
    %c0_16 = arith.constant 0 : index
    %c0_17 = arith.constant 0 : index
    %37 = vector.load %arg5[%c0_16, %c0_17] : memref<72x16xbf16, #tpu.memory_space<vmem>>, vector<72x16xbf16>
    %cst_18 = arith.constant dense<0.000000e+00> : vector<256x16xf32>
    %38 = tpu.matmul %36, %37, %cst_18 {dimension_numbers = #tpu.dot_dimension_numbers<[1], [0], [0], [1], [0, 0, 1, 1], [], []>} : vector<256x72xbf16>, vector<72x16xbf16>, vector<256x16xf32> -> vector<256x16xf32>
    %c0_19 = arith.constant 0 : index
    %c0_20 = arith.constant 0 : index
    %39 = vector.load %arg6[%c0_19, %c0_20] : memref<1x16xf32, #tpu.memory_space<vmem>>, vector<1x16xf32>
    %40 = vector.broadcast %39 : vector<1x16xf32> to vector<256x16xf32>
    %41 = arith.mulf %38, %40 : vector<256x16xf32>
    %c0_21 = arith.constant 0 : index
    %c0_22 = arith.constant 0 : index
    %42 = vector.load %arg7[%c0_21, %c0_22] : memref<1x16xf32, #tpu.memory_space<vmem>>, vector<1x16xf32>
    %43 = vector.broadcast %42 : vector<1x16xf32> to vector<256x16xf32>
    %44 = arith.addf %41, %43 : vector<256x16xf32>
    %cst_23 = arith.constant 0.000000e+00 : f32
    %45 = vector.broadcast %cst_23 : f32 to vector<256x16xf32>
    %46 = arith.maximumf %44, %45 : vector<256x16xf32>
    %c0_24 = arith.constant 0 : index
    %c0_25 = arith.constant 0 : index
    %47 = vector.load %arg12[%c0_24, %c0_25] : memref<1x16xf32, #tpu.memory_space<vmem>>, vector<1x16xf32>
    %cst_26 = arith.constant dense<0.000000e+00> : vector<16xf32>
    %48 = vector.multi_reduction <add>, %46, %cst_26 [0] : vector<256x16xf32> to vector<16xf32>
    %49 = vector.shape_cast %48 : vector<16xf32> to vector<1x16xf32>
    %50 = arith.addf %47, %49 : vector<1x16xf32>
    %c0_27 = arith.constant 0 : index
    %c0_28 = arith.constant 0 : index
    %51 = vector.load %arg12[%c0_27, %c0_28] : memref<1x16xf32, #tpu.memory_space<vmem>>, vector<1x16xf32>
    tpu.vector_store %arg12[%c0_27, %c0_28], %50 {strides = array<i32>} : memref<1x16xf32, #tpu.memory_space<vmem>>, vector<1x16xf32>,
    %c256_i32 = arith.constant 256 : i32
    %52 = arith.muli %arg1, %c256_i32 : i32
    %53 = tpu.assume_multiple %52, 128 : i32
    %54 = tpu.transpose %46, [1, 0] : vector<256x16xf32> -> vector<16x256xf32>
    %c0_29 = arith.constant 0 : index
    %c0_30 = arith.constant 0 : index
    %55 = arith.index_cast %53 : i32 to index
    %56 = vector.load %arg11[%c0_29, %c0_30, %55] : memref<1x16x256xf32, #tpu.memory_space<vmem>>, vector<1x16x256xf32>
    %57 = vector.shape_cast %56 : vector<1x16x256xf32> to vector<16x256xf32>
    %58 = vector.shape_cast %54 : vector<16x256xf32> to vector<1x16x256xf32>
    tpu.vector_store %arg11[%c0_29, %c0_30, %55], %58 {strides = array<i32>} : memref<1x16x256xf32, #tpu.memory_space<vmem>>, vector<1x16x256xf32>,
    %c0_i32_31 = arith.constant 0 : i32
    %59 = arith.cmpi eq, %arg1, %c0_i32_31 : i32
    %60 = arith.extui %59 : i1 to i32
    %c0_i32_32 = arith.constant 0 : i32
    %61 = arith.cmpi ne, %60, %c0_i32_32 : i32
    scf.if %61 {
      %c0_33 = arith.constant 0 : index
      %c0_34 = arith.constant 0 : index
      %62 = vector.load %arg8[%c0_33, %c0_34] : memref<16x16xf32, #tpu.memory_space<vmem>>, vector<16x16xf32>
      %c0_35 = arith.constant 0 : index
      %c0_36 = arith.constant 0 : index
      %63 = vector.load %arg12[%c0_35, %c0_36] : memref<1x16xf32, #tpu.memory_space<vmem>>, vector<1x16xf32>
      %64 = vector.broadcast %63 : vector<1x16xf32> to vector<16x16xf32>
      %65 = arith.mulf %62, %64 : vector<16x16xf32>
      %cst_37 = arith.constant dense<0.000000e+00> : vector<16xf32>
      %66 = vector.multi_reduction <add>, %65, %cst_37 [1] : vector<16x16xf32> to vector<16xf32>
      %67 = vector.shape_cast %66 : vector<16xf32> to vector<16x1xf32>
      %c0_38 = arith.constant 0 : index
      %c0_39 = arith.constant 0 : index
      %68 = vector.load %arg9[%c0_38, %c0_39] : memref<16x1xf32, #tpu.memory_space<vmem>>, vector<16x1xf32>
      %69 = arith.mulf %67, %68 : vector<16x1xf32>
      %c0_40 = arith.constant 0 : index
      %c0_41 = arith.constant 0 : index
      %70 = vector.load %arg10[%c0_40, %c0_41] : memref<16x1xf32, #tpu.memory_space<vmem>>, vector<16x1xf32>
      %71 = arith.addf %69, %70 : vector<16x1xf32>
      %cst_42 = arith.constant 0.000000e+00 : f32
      %72 = vector.broadcast %cst_42 : f32 to vector<16x1xf32>
      %73 = arith.subf %72, %71 : vector<16x1xf32>
      %74 = math.exp %73 : vector<16x1xf32>
      %cst_43 = arith.constant 1.000000e+00 : f32
      %75 = vector.broadcast %cst_43 : f32 to vector<16x1xf32>
      %76 = arith.addf %75, %74 : vector<16x1xf32>
      %cst_44 = arith.constant 1.000000e+00 : f32
      %77 = vector.broadcast %cst_44 : f32 to vector<16x1xf32>
      %78 = arith.divf %77, %76 : vector<16x1xf32>
      %c0_45 = arith.constant 0 : index
      %c0_46 = arith.constant 0 : index
      %c0_47 = arith.constant 0 : index
      %79 = vector.load %arg11[%c0_45, %c0_46, %c0_47] : memref<1x16x256xf32, #tpu.memory_space<vmem>>, vector<1x16x256xf32>
      %80 = vector.shape_cast %79 : vector<1x16x256xf32> to vector<16x256xf32>
      %81 = vector.broadcast %78 : vector<16x1xf32> to vector<16x256xf32>
      %82 = arith.mulf %80, %81 : vector<16x256xf32>
      %c0_48 = arith.constant 0 : index
      %c0_49 = arith.constant 0 : index
      %c0_50 = arith.constant 0 : index
      %83 = vector.load %arg11[%c0_48, %c0_49, %c0_50] : memref<1x16x256xf32, #tpu.memory_space<vmem>>, vector<1x16x256xf32>
      %84 = vector.shape_cast %83 : vector<1x16x256xf32> to vector<16x256xf32>
      %85 = vector.shape_cast %82 : vector<16x256xf32> to vector<1x16x256xf32>
      tpu.vector_store %arg11[%c0_48, %c0_49, %c0_50], %85 {strides = array<i32>} : memref<1x16x256xf32, #tpu.memory_space<vmem>>, vector<1x16x256xf32>,
    } else {
    }
    return
  }
  func.func @transform_0(%arg0: i32, %arg1: i32) -> (i32, i32, i32, i32) {
    %c0_i32 = arith.constant 0 : i32
    %c0_i32_0 = arith.constant 0 : i32
    %c0_i32_1 = arith.constant 0 : i32
    return %arg0, %arg1, %c0_i32, %c0_i32_0 : i32, i32, i32, i32
  }
  func.func @transform_1(%arg0: i32, %arg1: i32) -> (i32, i32, i32, i32) {
    %c16_i32 = arith.constant 16 : i32
    %0 = arith.muli %arg1, %c16_i32 : i32
    %c1_i32 = arith.constant 1 : i32
    %1 = arith.subi %0, %c1_i32 : i32
    %c0_i32 = arith.constant 0 : i32
    %2 = arith.maxsi %1, %c0_i32 : i32
    %c0_i32_0 = arith.constant 0 : i32
    %c0_i32_1 = arith.constant 0 : i32
    %c0_i32_2 = arith.constant 0 : i32
    return %arg0, %2, %c0_i32_0, %c0_i32_1 : i32, i32, i32, i32
  }
  func.func @transform_2(%arg0: i32, %arg1: i32) -> (i32, i32, i32, i32) {
    %c1_i32 = arith.constant 1 : i32
    %0 = arith.addi %arg1, %c1_i32 : i32
    %c16_i32 = arith.constant 16 : i32
    %1 = arith.muli %0, %c16_i32 : i32
    %c15_i32 = arith.constant 15 : i32
    %2 = arith.minsi %1, %c15_i32 : i32
    %c0_i32 = arith.constant 0 : i32
    %c0_i32_0 = arith.constant 0 : i32
    %c0_i32_1 = arith.constant 0 : i32
    return %arg0, %2, %c0_i32, %c0_i32_0 : i32, i32, i32, i32
  }
  func.func @transform_3(%arg0: i32, %arg1: i32) -> (i32, i32) {
    %c0_i32 = arith.constant 0 : i32
    %c0_i32_0 = arith.constant 0 : i32
    %c0_i32_1 = arith.constant 0 : i32
    return %c0_i32, %c0_i32_0 : i32, i32
  }
  func.func @transform_4(%arg0: i32, %arg1: i32) -> (i32, i32) {
    %c0_i32 = arith.constant 0 : i32
    %c0_i32_0 = arith.constant 0 : i32
    %c0_i32_1 = arith.constant 0 : i32
    return %c0_i32, %c0_i32_0 : i32, i32
  }
  func.func @transform_5(%arg0: i32, %arg1: i32) -> (i32, i32) {
    %c0_i32 = arith.constant 0 : i32
    %c0_i32_0 = arith.constant 0 : i32
    %c0_i32_1 = arith.constant 0 : i32
    return %c0_i32, %c0_i32_0 : i32, i32
  }
  func.func @transform_6(%arg0: i32, %arg1: i32) -> (i32, i32) {
    %c0_i32 = arith.constant 0 : i32
    %c0_i32_0 = arith.constant 0 : i32
    %c0_i32_1 = arith.constant 0 : i32
    return %c0_i32, %c0_i32_0 : i32, i32
  }
  func.func @transform_7(%arg0: i32, %arg1: i32) -> (i32, i32) {
    %c0_i32 = arith.constant 0 : i32
    %c0_i32_0 = arith.constant 0 : i32
    %c0_i32_1 = arith.constant 0 : i32
    return %c0_i32, %c0_i32_0 : i32, i32
  }
  func.func @transform_8(%arg0: i32, %arg1: i32) -> (i32, i32) {
    %c0_i32 = arith.constant 0 : i32
    %c0_i32_0 = arith.constant 0 : i32
    %c0_i32_1 = arith.constant 0 : i32
    return %c0_i32, %c0_i32_0 : i32, i32
  }
  func.func @transform_9(%arg0: i32, %arg1: i32) -> (i32, i32, i32) {
    %c0_i32 = arith.constant 0 : i32
    %c0_i32_0 = arith.constant 0 : i32
    %c0_i32_1 = arith.constant 0 : i32
    return %arg0, %c0_i32, %c0_i32_0 : i32, i32, i32
  }
}

</mosaic_0001>

<llo_original>
// kernel: attention_refinement.1
$region0: #{attention_refinement.1}
  #allocation0 [shape = 'u32[]', space=smem, size = 0x4, offset = 0x4, fixed_abs, tag = 'smem constant byte address 0x4 - core index']
  #allocation1 [shape = 'u32[144,128]{1,0:T(1,128)}', space=vmem, size = 0x12000, scoped, tag = 'internal scratch']
  #allocation2 [shape = 'f32[1,16]{1,0:T(1,128)}', space=vmem, size = 0x200, scoped, tag = 'scratch operand']
  %s0 = inlined_call_operand.vmem [shape: bf16[2,16,16,8], index: 0, kind: input, shape index: {}, may-alias: {0,1,2}]
  %s1 = inlined_call_operand.vmem [shape: bf16[2,16,16,8], index: 1, kind: input, shape index: {}, may-alias: {0,1,2}]
  %s2 = inlined_call_operand.vmem [shape: bf16[2,16,16,8], index: 2, kind: input, shape index: {}, may-alias: {0,1,2}]
  %s3 = inlined_call_operand.vmem [shape: bf16[72,16], index: 3, kind: input, shape index: {}]
  %s4 = inlined_call_operand.vmem [shape: f32[1,16], index: 4, kind: input, shape index: {}]
  %s5 = inlined_call_operand.vmem [shape: f32[1,16], index: 5, kind: input, shape index: {}]
  %s6 = inlined_call_operand.vmem [shape: f32[16,16], index: 6, kind: input, shape index: {}]
  %s7 = inlined_call_operand.vmem [shape: f32[16,1], index: 7, kind: input, shape index: {}]
  %s8 = inlined_call_operand.vmem [shape: f32[16,1], index: 8, kind: input, shape index: {}]
  %s9 = inlined_call_operand.vmem [shape: f32[2,16,256], index: 9, kind: output, shape index: {}]
  %s10 = sld [smem:[#allocation0]]
  $region77: #{attention_refinement.1} parent=0
    _
  %s12 = ssub.s32 1, %s10
  %s13 = scalar_select 0, %s12, %s10
  loop: start=0, step=1, limit=4
  $region2: #{attention_refinement.1} parent=0 // loop_pre_header
    _
  $region3: #{attention_refinement.1} parent=0 // loop_header
    %s15 = sphi 0, %s19
    %p16 = scmp.ge.s32.totalorder %s15, 4
    %s22 = sphi 0, %s34
    %s23 = sphi 0, %s30
    %s24 = sphi 0, %s22
    %s25 = sphi 0, %s23
    %s26 = sphi 0, %s24
    %s27 = sphi 0, %s25
    %s39 = sphi 0, %s41
    %s42 = sphi 0, %s39
    %s43 = sphi 0, %s42
    %s59 = sphi 0, %s43
    %s75 = sphi 0, %s77
    %s78 = sphi 0, %s75
    %s79 = sphi 0, %s78
    %s95 = sphi 0, %s79
    %s111 = sphi 0, %s113
    %s114 = sphi 0, %s111
    %s115 = sphi 0, %s114
    %s131 = sphi 0, %s115
    %s135 = sphi 0, %s135
    %s137 = sphi 0, %s135
    %s138 = sphi 0, %s137
    %s152 = sphi 0, %s138
    %s156 = sphi 0, %s156
    %s158 = sphi 0, %s156
    %s159 = sphi 0, %s158
    %s173 = sphi 0, %s159
    %s177 = sphi 0, %s177
    %s179 = sphi 0, %s177
    %s180 = sphi 0, %s179
    %s194 = sphi 0, %s180
    %s198 = sphi 0, %s198
    %s200 = sphi 0, %s198
    %s201 = sphi 0, %s200
    %s215 = sphi 0, %s201
    %s219 = sphi 0, %s219
    %s221 = sphi 0, %s219
    %s222 = sphi 0, %s221
    %s236 = sphi 0, %s222
    %s240 = sphi 0, %s240
    %s242 = sphi 0, %s240
    %s243 = sphi 0, %s242
    %s257 = sphi 0, %s243
    %s263 = sphi 0, %s265
    %s266 = sphi 0, %s263
    %s267 = sphi 0, %s266
    %s283 = sphi 0, %s267
  $region4: #{attention_refinement.1} parent=0 // loop_header_branch
    %18 = sbr.rel (%p16) target = $region8
  $region5: #{attention_refinement.1} parent=0 // loop_body
    %s20 = ssub.s32 %s15, 1
    %s21 = ssub.s32 %s15, 2
    %s28 = sadd.s32 1, %s23
    %p29 = scmp.ge.s32.totalorder %s28, 1
    %s30 = scalar_select %p29, 0, %s28
    %s31 = sadd.s32 1, %s22
    %s32 = scalar_select %p29, %s31, %s22
    %p33 = scmp.ge.s32.totalorder %s32, 2
    %s34 = scalar_select %p33, 0, %s32
    %s35 = ssub.s32 %s22, %s34
    %s36 = ssub.s32 %s23, %s30
    %s37 = sor.u32 %s35, %s36
    %p38 = scmp.eq.s32.totalorder %s37, 0
    %s40 = sadd.s32 %s39, 1
    %s41 = scalar_select %p38, %s39, %s40
    %p44 = pneg %p38
    %p45 = scmp.eq.s32.totalorder %s15, 1
    %p46 = por %p44, %p45
    %p47 = scmp.ne.s32.totalorder %s39, %s42
    %p48 = scmp.eq.s32.totalorder %s15, 0
    %p49 = por %p47, %p48
    %p50 = scmp.ne.s32.totalorder %s39, %s42
    %p51 = scmp.eq.s32.totalorder %s20, 1
    %p52 = por %p50, %p51
    %p53 = scmp.ne.s32.totalorder %s42, %s43
    %p54 = scmp.eq.s32.totalorder %s20, 0
    %p55 = por %p53, %p54
    %p56 = scmp.ne.s32.totalorder %s42, %s43
    %p57 = scmp.eq.s32.totalorder %s21, 1
    %p58 = por %p56, %p57
    %p60 = scmp.ne.s32.totalorder %s43, %s59
    %p61 = scmp.eq.s32.totalorder %s21, 0
    %p62 = por %p60, %p61
    %s63 = smul.u32 %s23, 16
    %s64 = ssub.s32 %s63, 1
    %p65 = scmp.gt.s32.totalorder %s64, 0
    %s66 = scalar_select %p65, %s64, 0
    %s67 = smul.u32 %s30, 16
    %s68 = ssub.s32 %s67, 1
    %p69 = scmp.gt.s32.totalorder %s68, 0
    %s70 = scalar_select %p69, %s68, 0
    %s71 = ssub.s32 %s22, %s34
    %s72 = ssub.s32 %s66, %s70
    %s73 = sor.u32 %s71, %s72
    %p74 = scmp.eq.s32.totalorder %s73, 0
    %s76 = sadd.s32 %s75, 1
    %s77 = scalar_select %p74, %s75, %s76
    %p80 = pneg %p74
    %p81 = scmp.eq.s32.totalorder %s15, 1
    %p82 = por %p80, %p81
    %p83 = scmp.ne.s32.totalorder %s75, %s78
    %p84 = scmp.eq.s32.totalorder %s15, 0
    %p85 = por %p83, %p84
    %p86 = scmp.ne.s32.totalorder %s75, %s78
    %p87 = scmp.eq.s32.totalorder %s20, 1
    %p88 = por %p86, %p87
    %p89 = scmp.ne.s32.totalorder %s78, %s79
    %p90 = scmp.eq.s32.totalorder %s20, 0
    %p91 = por %p89, %p90
    %p92 = scmp.ne.s32.totalorder %s78, %s79
    %p93 = scmp.eq.s32.totalorder %s21, 1
    %p94 = por %p92, %p93
    %p96 = scmp.ne.s32.totalorder %s79, %s95
    %p97 = scmp.eq.s32.totalorder %s21, 0
    %p98 = por %p96, %p97
    %s99 = sadd.s32 %s23, 1
    %s100 = smul.u32 %s99, 16
    %p101 = scmp.lt.s32.totalorder %s100, 15
    %s102 = scalar_select %p101, %s100, 15
    %s103 = sadd.s32 %s30, 1
    %s104 = smul.u32 %s103, 16
    %p105 = scmp.lt.s32.totalorder %s104, 15
    %s106 = scalar_select %p105, %s104, 15
    %s107 = ssub.s32 %s22, %s34
    %s108 = ssub.s32 %s102, %s106
    %s109 = sor.u32 %s107, %s108
    %p110 = scmp.eq.s32.totalorder %s109, 0
    %s112 = sadd.s32 %s111, 1
    %s113 = scalar_select %p110, %s111, %s112
    %p116 = pneg %p110
    %p117 = scmp.eq.s32.totalorder %s15, 1
    %p118 = por %p116, %p117
    %p119 = scmp.ne.s32.totalorder %s111, %s114
    %p120 = scmp.eq.s32.totalorder %s15, 0
    %p121 = por %p119, %p120
    %p122 = scmp.ne.s32.totalorder %s111, %s114
    %p123 = scmp.eq.s32.totalorder %s20, 1
    %p124 = por %p122, %p123
    %p125 = scmp.ne.s32.totalorder %s114, %s115
    %p126 = scmp.eq.s32.totalorder %s20, 0
    %p127 = por %p125, %p126
    %p128 = scmp.ne.s32.totalorder %s114, %s115
    %p129 = scmp.eq.s32.totalorder %s21, 1
    %p130 = por %p128, %p129
    %p132 = scmp.ne.s32.totalorder %s115, %s131
    %p133 = scmp.eq.s32.totalorder %s21, 0
    %p134 = por %p132, %p133
    %s136 = sadd.s32 %s135, 1
    %p139 = scmp.eq.s32.totalorder %s15, 1
    %p140 = scmp.ne.s32.totalorder %s135, %s137
    %p141 = scmp.eq.s32.totalorder %s15, 0
    %p142 = por %p140, %p141
    %p143 = scmp.ne.s32.totalorder %s135, %s137
    %p144 = scmp.eq.s32.totalorder %s20, 1
    %p145 = por %p143, %p144
    %p146 = scmp.ne.s32.totalorder %s137, %s138
    %p147 = scmp.eq.s32.totalorder %s20, 0
    %p148 = por %p146, %p147
    %p149 = scmp.ne.s32.totalorder %s137, %s138
    %p150 = scmp.eq.s32.totalorder %s21, 1
    %p151 = por %p149, %p150
    %p153 = scmp.ne.s32.totalorder %s138, %s152
    %p154 = scmp.eq.s32.totalorder %s21, 0
    %p155 = por %p153, %p154
    %s157 = sadd.s32 %s156, 1
    %p160 = scmp.eq.s32.totalorder %s15, 1
    %p161 = scmp.ne.s32.totalorder %s156, %s158
    %p162 = scmp.eq.s32.totalorder %s15, 0
    %p163 = por %p161, %p162
    %p164 = scmp.ne.s32.totalorder %s156, %s158
    %p165 = scmp.eq.s32.totalorder %s20, 1
    %p166 = por %p164, %p165
    %p167 = scmp.ne.s32.totalorder %s158, %s159
    %p168 = scmp.eq.s32.totalorder %s20, 0
    %p169 = por %p167, %p168
    %p170 = scmp.ne.s32.totalorder %s158, %s159
    %p171 = scmp.eq.s32.totalorder %s21, 1
    %p172 = por %p170, %p171
    %p174 = scmp.ne.s32.totalorder %s159, %s173
    %p175 = scmp.eq.s32.totalorder %s21, 0
    %p176 = por %p174, %p175
    %s178 = sadd.s32 %s177, 1
    %p181 = scmp.eq.s32.totalorder %s15, 1
    %p182 = scmp.ne.s32.totalorder %s177, %s179
    %p183 = scmp.eq.s32.totalorder %s15, 0
    %p184 = por %p182, %p183
    %p185 = scmp.ne.s32.totalorder %s177, %s179
    %p186 = scmp.eq.s32.totalorder %s20, 1
    %p187 = por %p185, %p186
    %p188 = scmp.ne.s32.totalorder %s179, %s180
    %p189 = scmp.eq.s32.totalorder %s20, 0
    %p190 = por %p188, %p189
    %p191 = scmp.ne.s32.totalorder %s179, %s180
    %p192 = scmp.eq.s32.totalorder %s21, 1
    %p193 = por %p191, %p192
    %p195 = scmp.ne.s32.totalorder %s180, %s194
    %p196 = scmp.eq.s32.totalorder %s21, 0
    %p197 = por %p195, %p196
    %s199 = sadd.s32 %s198, 1
    %p202 = scmp.eq.s32.totalorder %s15, 1
    %p203 = scmp.ne.s32.totalorder %s198, %s200
    %p204 = scmp.eq.s32.totalorder %s15, 0
    %p205 = por %p203, %p204
    %p206 = scmp.ne.s32.totalorder %s198, %s200
    %p207 = scmp.eq.s32.totalorder %s20, 1
    %p208 = por %p206, %p207
    %p209 = scmp.ne.s32.totalorder %s200, %s201
    %p210 = scmp.eq.s32.totalorder %s20, 0
    %p211 = por %p209, %p210
    %p212 = scmp.ne.s32.totalorder %s200, %s201
    %p213 = scmp.eq.s32.totalorder %s21, 1
    %p214 = por %p212, %p213
    %p216 = scmp.ne.s32.totalorder %s201, %s215
    %p217 = scmp.eq.s32.totalorder %s21, 0
    %p218 = por %p216, %p217
    %s220 = sadd.s32 %s219, 1
    %p223 = scmp.eq.s32.totalorder %s15, 1
    %p224 = scmp.ne.s32.totalorder %s219, %s221
    %p225 = scmp.eq.s32.totalorder %s15, 0
    %p226 = por %p224, %p225
    %p227 = scmp.ne.s32.totalorder %s219, %s221
    %p228 = scmp.eq.s32.totalorder %s20, 1
    %p229 = por %p227, %p228
    %p230 = scmp.ne.s32.totalorder %s221, %s222
    %p231 = scmp.eq.s32.totalorder %s20, 0
    %p232 = por %p230, %p231
    %p233 = scmp.ne.s32.totalorder %s221, %s222
    %p234 = scmp.eq.s32.totalorder %s21, 1
    %p235 = por %p233, %p234
    %p237 = scmp.ne.s32.totalorder %s222, %s236
    %p238 = scmp.eq.s32.totalorder %s21, 0
    %p239 = por %p237, %p238
    %s241 = sadd.s32 %s240, 1
    %p244 = scmp.eq.s32.totalorder %s15, 1
    %p245 = scmp.ne.s32.totalorder %s240, %s242
    %p246 = scmp.eq.s32.totalorder %s15, 0
    %p247 = por %p245, %p246
    %p248 = scmp.ne.s32.totalorder %s240, %s242
    %p249 = scmp.eq.s32.totalorder %s20, 1
    %p250 = por %p248, %p249
    %p251 = scmp.ne.s32.totalorder %s242, %s243
    %p252 = scmp.eq.s32.totalorder %s20, 0
    %p253 = por %p251, %p252
    %p254 = scmp.ne.s32.totalorder %s242, %s243
    %p255 = scmp.eq.s32.totalorder %s21, 1
    %p256 = por %p254, %p255
    %p258 = scmp.ne.s32.totalorder %s243, %s257
    %p259 = scmp.eq.s32.totalorder %s21, 0
    %p260 = por %p258, %p259
    %s261 = ssub.s32 %s22, %s34
    %p262 = scmp.eq.s32.totalorder %s261, 0
    %s264 = sadd.s32 %s263, 1
    %s265 = scalar_select %p262, %s263, %s264
    %p268 = pneg %p262
    %p269 = scmp.eq.s32.totalorder %s15, 1
    %p270 = por %p268, %p269
    %p271 = scmp.ne.s32.totalorder %s263, %s266
    %p272 = scmp.eq.s32.totalorder %s15, 0
    %p273 = por %p271, %p272
    %p274 = scmp.ne.s32.totalorder %s263, %s266
    %p275 = scmp.eq.s32.totalorder %s20, 1
    %p276 = por %p274, %p275
    %p277 = scmp.ne.s32.totalorder %s266, %s267
    %p278 = scmp.eq.s32.totalorder %s20, 0
    %p279 = por %p277, %p278
    %p280 = scmp.ne.s32.totalorder %s266, %s267
    %p281 = scmp.eq.s32.totalorder %s21, 1
    %p282 = por %p280, %p281
    %p284 = scmp.ne.s32.totalorder %s267, %s283
    %p285 = scmp.eq.s32.totalorder %s21, 0
    %p286 = por %p284, %p285
    %p287 = scmp.le.s32.totalorder 1, %s15
    %p288 = scmp.lt.s32.totalorder %s15, 3
    %p289 = pnand %p287, %p288
    %p290 = pneg %p289
    // Predicated region
    $region9: #{attention_refinement.1} parent=5 // pred_check
      _
    $region10: #{attention_refinement.1} parent=5 // pred_check_branch
      %292 = sbr.rel (%p289) target = $region12
    $region11: #{attention_refinement.1} parent=5 // pred_region
      %s293 = ssub.s32 %s15, 1
      // Predicated region
      $region13: #{attention_refinement.1} parent=11 // pred_check
        %p294 = pneg %p148
      $region14: #{attention_refinement.1} parent=11 // pred_check_branch
        %296 = sbr.rel (%p294) target = $region16
      $region15: #{attention_refinement.1} parent=11 // pred_region
        _
      $region16: #{attention_refinement.1} parent=11 // pred_fallthru
        _
      // Predicated region
      $region17: #{attention_refinement.1} parent=11 // pred_check
        %p297 = pneg %p169
      $region18: #{attention_refinement.1} parent=11 // pred_check_branch
        %299 = sbr.rel (%p297) target = $region20
      $region19: #{attention_refinement.1} parent=11 // pred_region
        _
      $region20: #{attention_refinement.1} parent=11 // pred_fallthru
        _
      // Predicated region
      $region21: #{attention_refinement.1} parent=11 // pred_check
        %p300 = pneg %p190
      $region22: #{attention_refinement.1} parent=11 // pred_check_branch
        %302 = sbr.rel (%p300) target = $region24
      $region23: #{attention_refinement.1} parent=11 // pred_region
        _
      $region24: #{attention_refinement.1} parent=11 // pred_fallthru
        _
      // Predicated region
      $region25: #{attention_refinement.1} parent=11 // pred_check
        %p303 = pneg %p211
      $region26: #{attention_refinement.1} parent=11 // pred_check_branch
        %305 = sbr.rel (%p303) target = $region28
      $region27: #{attention_refinement.1} parent=11 // pred_region
        _
      $region28: #{attention_refinement.1} parent=11 // pred_fallthru
        _
      // Predicated region
      $region29: #{attention_refinement.1} parent=11 // pred_check
        %p306 = pneg %p232
      $region30: #{attention_refinement.1} parent=11 // pred_check_branch
        %308 = sbr.rel (%p306) target = $region32
      $region31: #{attention_refinement.1} parent=11 // pred_region
        _
      $region32: #{attention_refinement.1} parent=11 // pred_fallthru
        _
      // Predicated region
      $region33: #{attention_refinement.1} parent=11 // pred_check
        %p309 = pneg %p253
      $region34: #{attention_refinement.1} parent=11 // pred_check_branch
        %311 = sbr.rel (%p309) target = $region36
      $region35: #{attention_refinement.1} parent=11 // pred_region
        _
      $region36: #{attention_refinement.1} parent=11 // pred_fallthru
        _
    $region12: #{attention_refinement.1} parent=5 // pred_fallthru
      _
    %p312 = scmp.lt.s32.totalorder %s15, 2
    // Predicated region
    $region37: #{attention_refinement.1} parent=5 // pred_check
      %p313 = pneg %p312
    $region38: #{attention_refinement.1} parent=5 // pred_check_branch
      %315 = sbr.rel (%p313) target = $region40
    $region39: #{attention_refinement.1} parent=5 // pred_region
      // Predicated region
      $region41: #{attention_refinement.1} parent=39 // pred_check
        %p316 = pneg %p49
      $region42: #{attention_refinement.1} parent=39 // pred_check_branch
        %318 = sbr.rel (%p316) target = $region44
      $region43: #{attention_refinement.1} parent=39 // pred_region
        %s319 = smul.u32 16, %s23
        %p320 = scmp.lt.s32.totalorder %s22, 1
        %s321 = scalar_select %p320, %s22, 1
        %p322 = scmp.lt.s32.totalorder %s319, 15
        %s323 = scalar_select %p322, %s319, 15
        %s324 = smul.addr %s323, 2
        %s325 = smul.addr %s321, 32
        %s326 = sadd.s32 %s324, %s325
        %s327 = smul.addr %s326, 4
        %s328 = scalar_lea.vmem %s0, %s327
        %s329 = smul.u32 16, %s23
      $region44: #{attention_refinement.1} parent=39 // pred_fallthru
        _
      // Predicated region
      $region45: #{attention_refinement.1} parent=39 // pred_check
        %p330 = pneg %p85
      $region46: #{attention_refinement.1} parent=39 // pred_check_branch
        %332 = sbr.rel (%p330) target = $region48
      $region47: #{attention_refinement.1} parent=39 // pred_region
        %s333 = smul.u32 %s23, 16
        %s334 = ssub.s32 %s333, 1
        %p335 = scmp.gt.s32.totalorder %s334, 0
        %s336 = scalar_select %p335, %s334, 0
        %p337 = scmp.lt.s32.totalorder %s22, 1
        %s338 = scalar_select %p337, %s22, 1
        %p339 = scmp.lt.s32.totalorder %s336, 15
        %s340 = scalar_select %p339, %s336, 15
        %s341 = smul.addr %s340, 2
        %s342 = smul.addr %s338, 32
        %s343 = sadd.s32 %s341, %s342
        %s344 = smul.addr %s343, 4
        %s345 = scalar_lea.vmem %s1, %s344
        %s346 = smul.u32 %s23, 16
        %s347 = ssub.s32 %s346, 1
        %p348 = scmp.gt.s32.totalorder %s347, 0
        %s349 = scalar_select %p348, %s347, 0
      $region48: #{attention_refinement.1} parent=39 // pred_fallthru
        _
      // Predicated region
      $region49: #{attention_refinement.1} parent=39 // pred_check
        %p350 = pneg %p121
      $region50: #{attention_refinement.1} parent=39 // pred_check_branch
        %352 = sbr.rel (%p350) target = $region52
      $region51: #{attention_refinement.1} parent=39 // pred_region
        %s353 = sadd.s32 %s23, 1
        %s354 = smul.u32 %s353, 16
        %p355 = scmp.lt.s32.totalorder %s354, 15
        %s356 = scalar_select %p355, %s354, 15
        %p357 = scmp.lt.s32.totalorder %s22, 1
        %s358 = scalar_select %p357, %s22, 1
        %p359 = scmp.lt.s32.totalorder %s356, 15
        %s360 = scalar_select %p359, %s356, 15
        %s361 = smul.addr %s360, 2
        %s362 = smul.addr %s358, 32
        %s363 = sadd.s32 %s361, %s362
        %s364 = smul.addr %s363, 4
        %s365 = scalar_lea.vmem %s2, %s364
        %s366 = sadd.s32 %s23, 1
        %s367 = smul.u32 %s366, 16
        %p368 = scmp.lt.s32.totalorder %s367, 15
        %s369 = scalar_select %p368, %s367, 15
      $region52: #{attention_refinement.1} parent=39 // pred_fallthru
        _
    $region40: #{attention_refinement.1} parent=5 // pred_fallthru
      _
    %p370 = scmp.le.s32.totalorder 1, %s15
    %p371 = scmp.lt.s32.totalorder %s15, 3
    %p372 = pnand %p370, %p371
    %p373 = pneg %p372
    // Predicated region
    $region53: #{attention_refinement.1} parent=5 // pred_check
      _
    $region54: #{attention_refinement.1} parent=5 // pred_check_branch
      %375 = sbr.rel (%p372) target = $region56
    $region55: #{attention_refinement.1} parent=5 // pred_region
      %s376 = ssub.s32 %s15, 1
      %s377 = smul.u32 16, %s25
      %p378 = scmp.lt.s32.totalorder %s24, 1
      %s379 = scalar_select %p378, %s24, 1
      %p380 = scmp.lt.s32.totalorder %s377, 15
      %s381 = scalar_select %p380, %s377, 15
      %s382 = smul.addr %s381, 2
      %s383 = smul.addr %s379, 32
      %s384 = sadd.s32 %s382, %s383
      %s385 = smul.addr %s384, 4
      %s386 = scalar_lea.vmem %s0, %s385
      %p387 = pneg %p55
      %p388 = pneg %p52
      %s389 = smul.u32 %s25, 16
      %s390 = ssub.s32 %s389, 1
      %p391 = scmp.gt.s32.totalorder %s390, 0
      %s392 = scalar_select %p391, %s390, 0
      %p393 = scmp.lt.s32.totalorder %s24, 1
      %s394 = scalar_select %p393, %s24, 1
      %p395 = scmp.lt.s32.totalorder %s392, 15
      %s396 = scalar_select %p395, %s392, 15
      %s397 = smul.addr %s396, 2
      %s398 = smul.addr %s394, 32
      %s399 = sadd.s32 %s397, %s398
      %s400 = smul.addr %s399, 4
      %s401 = scalar_lea.vmem %s1, %s400
      %p402 = pneg %p91
      %p403 = pneg %p88
      %s404 = sadd.s32 %s25, 1
      %s405 = smul.u32 %s404, 16
      %p406 = scmp.lt.s32.totalorder %s405, 15
      %s407 = scalar_select %p406, %s405, 15
      %p408 = scmp.lt.s32.totalorder %s24, 1
      %s409 = scalar_select %p408, %s24, 1
      %p410 = scmp.lt.s32.totalorder %s407, 15
      %s411 = scalar_select %p410, %s407, 15
      %s412 = smul.addr %s411, 2
      %s413 = smul.addr %s409, 32
      %s414 = sadd.s32 %s412, %s413
      %s415 = smul.addr %s414, 4
      %s416 = scalar_lea.vmem %s2, %s415
      %p417 = pneg %p127
      %p418 = pneg %p124
      %p419 = pneg %p148
      %p420 = pneg %p145
      %p421 = pneg %p169
      %p422 = pneg %p166
      %p423 = pneg %p190
      %p424 = pneg %p187
      %p425 = pneg %p211
      %p426 = pneg %p208
      %p427 = pneg %p232
      %p428 = pneg %p229
      %p429 = pneg %p253
      %p430 = pneg %p250
      %p431 = pneg %p279
      %p432 = pneg %p276
      %p433 = scmp.lt.s32.totalorder %s24, 1
      %s434 = scalar_select %p433, %s24, 1
      %s435 = smul.addr %s434, 4
      %s436 = smul.addr %s435, 8
      %s437 = scalar_lea.vmem %s9, %s436
      %s438 = smul.u32 16, %s25
      %p439 = scmp.lt.s32.totalorder %s24, 1
      %s440 = scalar_select %p439, %s24, 1
      %p441 = scmp.lt.s32.totalorder %s438, 15
      %s442 = scalar_select %p441, %s438, 15
      %s443 = smul.addr %s442, 2
      %s444 = smul.addr %s440, 32
      %s445 = sadd.s32 %s443, %s444
      %s446 = smul.addr %s445, 4
      %s447 = scalar_lea.vmem %s0, %s446
      %s448 = smul.u32 16, %s25
      %s449 = smul.u32 %s25, 16
      %s450 = ssub.s32 %s449, 1
      %p451 = scmp.gt.s32.totalorder %s450, 0
      %s452 = scalar_select %p451, %s450, 0
      %p453 = scmp.lt.s32.totalorder %s24, 1
      %s454 = scalar_select %p453, %s24, 1
      %p455 = scmp.lt.s32.totalorder %s452, 15
      %s456 = scalar_select %p455, %s452, 15
      %s457 = smul.addr %s456, 2
      %s458 = smul.addr %s454, 32
      %s459 = sadd.s32 %s457, %s458
      %s460 = smul.addr %s459, 4
      %s461 = scalar_lea.vmem %s1, %s460
      %s462 = smul.u32 %s25, 16
      %s463 = ssub.s32 %s462, 1
      %p464 = scmp.gt.s32.totalorder %s463, 0
      %s465 = scalar_select %p464, %s463, 0
      %s466 = sadd.s32 %s25, 1
      %s467 = smul.u32 %s466, 16
      %p468 = scmp.lt.s32.totalorder %s467, 15
      %s469 = scalar_select %p468, %s467, 15
      %p470 = scmp.lt.s32.totalorder %s24, 1
      %s471 = scalar_select %p470, %s24, 1
      %p472 = scmp.lt.s32.totalorder %s469, 15
      %s473 = scalar_select %p472, %s469, 15
      %s474 = smul.addr %s473, 2
      %s475 = smul.addr %s471, 32
      %s476 = sadd.s32 %s474, %s475
      %s477 = smul.addr %s476, 4
      %s478 = scalar_lea.vmem %s2, %s477
      %s479 = sadd.s32 %s25, 1
      %s480 = smul.u32 %s479, 16
      %p481 = scmp.lt.s32.totalorder %s480, 15
      %s482 = scalar_select %p481, %s480, 15
      %p483 = scmp.lt.s32.totalorder %s24, 1
      %s484 = scalar_select %p483, %s24, 1
      %s485 = smul.addr %s484, 4
      %s486 = smul.addr %s485, 8
      %s487 = scalar_lea.vmem %s9, %s486
      %p489 = scmp.eq.s32.totalorder %s25, 0
      // Predicated region
      $region57: #{attention_refinement.1} parent=55 // pred_check
        %p490 = pneg %p489
      $region58: #{attention_refinement.1} parent=55 // pred_check_branch
        %492 = sbr.rel (%p490) target = $region60
      $region59: #{attention_refinement.1} parent=55 // pred_region
        %vm493 = vcmask 122880
        %494 = vst.msk [vmem:[#allocation2] sm:$0x1] %vm493, 0.0
      $region60: #{attention_refinement.1} parent=55 // pred_fallthru
        _
      %v495 = vld [vmem:[%s461] sm:$0xf]
      %v496 = vld [vmem:[%s461 + $0x4] sm:$0xf]
      %v497 = vld [vmem:[%s478] sm:$0xf]
      %v498 = vld [vmem:[%s478 + $0x4] sm:$0xf]
      %s499 = scalar_select %p489, 1, 0
      %v500 = vstv %s499
      %vm501 = vcmp.eq.s32.totalorder %v500, 1
      %v502 = vsel %vm501, 0, %v495
      %v503 = vsel %vm501, 0, %v496
      %v504 = vsel %vm501, 0, %v497
      %v505 = vsel %vm501, 0, %v498
      %v506 = vld [vmem:[%s447] sm:$0xf]
      %v507 = vld [vmem:[%s447 + $0x4] sm:$0xf]
      %v508 = vld [vmem:[%s447 + $0x8] sm:$0xf]
      %v509 = vld [vmem:[%s447 + $0xc] sm:$0xf]
      %v510 = vld [vmem:[%s447 + $0x10] sm:$0xf]
      %v511 = vld [vmem:[%s447 + $0x14] sm:$0xf]
      %v512 = vld [vmem:[%s447 + $0x18] sm:$0xf]
      %v513 = vld [vmem:[%s447 + $0x1c] sm:$0xf]
      %v514 = vld [vmem:[%s447 + $0x20] sm:$0xf]
      %v515 = vld [vmem:[%s447 + $0x24] sm:$0xf]
      %v516 = vld [vmem:[%s447 + $0x28] sm:$0xf]
      %v517 = vld [vmem:[%s447 + $0x2c] sm:$0xf]
      %v518 = vld [vmem:[%s447 + $0x30] sm:$0xf]
      %v519 = vld [vmem:[%s447 + $0x34] sm:$0xf]
      %v520 = vld [vmem:[%s447 + $0x38] sm:$0xf]
      %v521 = vld [vmem:[%s447 + $0x3c] sm:$0xf]
      %v522 = vld [vmem:[%s447 + $0x40] sm:$0xf]
      %v523 = vld [vmem:[%s447 + $0x44] sm:$0xf]
      %v524 = vld [vmem:[%s447 + $0x48] sm:$0xf]
      %v525 = vld [vmem:[%s447 + $0x4c] sm:$0xf]
      %v526 = vld [vmem:[%s447 + $0x50] sm:$0xf]
      %v527 = vld [vmem:[%s447 + $0x54] sm:$0xf]
      %v528 = vld [vmem:[%s447 + $0x58] sm:$0xf]
      %v529 = vld [vmem:[%s447 + $0x5c] sm:$0xf]
      %v530 = vld [vmem:[%s447 + $0x60] sm:$0xf]
      %v531 = vld [vmem:[%s447 + $0x64] sm:$0xf]
      %v532 = vld [vmem:[%s447 + $0x68] sm:$0xf]
      %v533 = vld [vmem:[%s447 + $0x6c] sm:$0xf]
      %v534 = vld [vmem:[%s447 + $0x70] sm:$0xf]
      %v535 = vld [vmem:[%s447 + $0x74] sm:$0xf]
      %v536 = vld [vmem:[%s447 + $0x78] sm:$0xf]
      %v537 = vld [vmem:[%s447 + $0x7c] sm:$0xf]
      %v574 = vunpack.c.l.b16 %v502
      %v575 = vunpack.c.l.b16 %v503
      %v576 = vunpack.c.l.b16 %v506
      %v577 = vunpack.c.l.b16 %v507
      %v578 = vunpack.c.l.b16 %v508
      %v579 = vunpack.c.l.b16 %v509
      %v580 = vunpack.c.l.b16 %v510
      %v581 = vunpack.c.l.b16 %v511
      %v582 = vunpack.c.l.b16 %v512
      %v583 = vunpack.c.l.b16 %v513
      %v584 = vunpack.c.l.b16 %v514
      %v585 = vunpack.c.l.b16 %v515
      %v586 = vunpack.c.l.b16 %v516
      %v587 = vunpack.c.l.b16 %v517
      %v588 = vunpack.c.l.b16 %v518
      %v589 = vunpack.c.l.b16 %v519
      %v590 = vunpack.c.l.b16 %v520
      %v591 = vunpack.c.l.b16 %v521
      %v592 = vunpack.c.l.b16 %v522
      %v593 = vunpack.c.l.b16 %v523
      %v594 = vunpack.c.l.b16 %v524
      %v595 = vunpack.c.l.b16 %v525
      %v596 = vunpack.c.l.b16 %v526
      %v597 = vunpack.c.l.b16 %v527
      %v598 = vunpack.c.l.b16 %v528
      %v599 = vunpack.c.l.b16 %v529
      %v600 = vunpack.c.l.b16 %v530
      %v601 = vunpack.c.l.b16 %v531
      %v602 = vunpack.c.l.b16 %v532
      %v603 = vunpack.c.l.b16 %v533
      %v604 = vunpack.c.l.b16 %v534
      %v605 = vunpack.c.l.b16 %v535
      %v606 = vunpack.c.l.b16 %v536
      %v607 = vunpack.c.l.b16 %v537
      %v608 = vunpack.c.l.b16 %v504
      %v609 = vunpack.c.l.b16 %v505
      %v610 = vpack.c.b16 %v575, %v574
      %v611 = vpack.c.b16 %v577, %v576
      %v612 = vpack.c.b16 %v579, %v578
      %v613 = vpack.c.b16 %v581, %v580
      %v614 = vpack.c.b16 %v583, %v582
      %v615 = vpack.c.b16 %v585, %v584
      %v616 = vpack.c.b16 %v587, %v586
      %v617 = vpack.c.b16 %v589, %v588
      %v618 = vpack.c.b16 %v591, %v590
      %v619 = vpack.c.b16 %v593, %v592
      %v620 = vpack.c.b16 %v595, %v594
      %v621 = vpack.c.b16 %v597, %v596
      %v622 = vpack.c.b16 %v599, %v598
      %v623 = vpack.c.b16 %v601, %v600
      %v624 = vpack.c.b16 %v603, %v602
      %v625 = vpack.c.b16 %v605, %v604
      %v626 = vpack.c.b16 %v607, %v606
      %v627 = vpack.c.b16 %v609, %v608
      %v629 = vshrl.u32 %v610, 16
      %v631 = vrot.slane %v629, 7
      %v632 = vshll.u32 %v610, 16
      %v634 = vor.u32 %v631, %v632
      %v636 = vshrl.u32 %v611, 16
      %v638 = vrot.slane %v636, 7
      %v639 = vshll.u32 %v611, 16
      %v641 = vor.u32 %v638, %v639
      %v643 = vshrl.u32 %v612, 16
      %v645 = vrot.slane %v643, 7
      %v646 = vshll.u32 %v612, 16
      %v648 = vor.u32 %v645, %v646
      %v650 = vshrl.u32 %v613, 16
      %v652 = vrot.slane %v650, 7
      %v653 = vshll.u32 %v613, 16
      %v655 = vor.u32 %v652, %v653
      %v657 = vshrl.u32 %v614, 16
      %v659 = vrot.slane %v657, 7
      %v660 = vshll.u32 %v614, 16
      %v662 = vor.u32 %v659, %v660
      %v664 = vshrl.u32 %v615, 16
      %v666 = vrot.slane %v664, 7
      %v667 = vshll.u32 %v615, 16
      %v669 = vor.u32 %v666, %v667
      %v671 = vshrl.u32 %v616, 16
      %v673 = vrot.slane %v671, 7
      %v674 = vshll.u32 %v616, 16
      %v676 = vor.u32 %v673, %v674
      %v678 = vshrl.u32 %v617, 16
      %v680 = vrot.slane %v678, 7
      %v681 = vshll.u32 %v617, 16
      %v683 = vor.u32 %v680, %v681
      %v685 = vshrl.u32 %v618, 16
      %v687 = vrot.slane %v685, 7
      %v688 = vshll.u32 %v618, 16
      %v690 = vor.u32 %v687, %v688
      %v692 = vshrl.u32 %v619, 16
      %v694 = vrot.slane %v692, 7
      %v695 = vshll.u32 %v619, 16
      %v697 = vor.u32 %v694, %v695
      %v699 = vshrl.u32 %v620, 16
      %v701 = vrot.slane %v699, 7
      %v702 = vshll.u32 %v620, 16
      %v704 = vor.u32 %v701, %v702
      %v706 = vshrl.u32 %v621, 16
      %v708 = vrot.slane %v706, 7
      %v709 = vshll.u32 %v621, 16
      %v711 = vor.u32 %v708, %v709
      %v713 = vshrl.u32 %v622, 16
      %v715 = vrot.slane %v713, 7
      %v716 = vshll.u32 %v622, 16
      %v718 = vor.u32 %v715, %v716
      %v720 = vshrl.u32 %v623, 16
      %v722 = vrot.slane %v720, 7
      %v723 = vshll.u32 %v623, 16
      %v725 = vor.u32 %v722, %v723
      %v727 = vshrl.u32 %v624, 16
      %v729 = vrot.slane %v727, 7
      %v730 = vshll.u32 %v624, 16
      %v732 = vor.u32 %v729, %v730
      %v734 = vshrl.u32 %v625, 16
      %v736 = vrot.slane %v734, 7
      %v737 = vshll.u32 %v625, 16
      %v739 = vor.u32 %v736, %v737
      %v741 = vshrl.u32 %v626, 16
      %v743 = vrot.slane %v741, 7
      %v744 = vshll.u32 %v626, 16
      %v746 = vor.u32 %v743, %v744
      %v748 = vshrl.u32 %v627, 16
      %v750 = vrot.slane %v748, 7
      %v751 = vshll.u32 %v627, 16
      %v753 = vor.u32 %v750, %v751
      %vm790 = vcmask 1040384
      %vm791 = vsmask.f32 256
      %vm792 = vmand %vm790, %vm791
      %v793 = vsel %vm792, 0, %v634
      %v794 = vsel %vm792, 0, %v641
      %v795 = vsel %vm792, 0, %v648
      %v796 = vsel %vm792, 0, %v655
      %v797 = vsel %vm792, 0, %v662
      %v798 = vsel %vm792, 0, %v669
      %v799 = vsel %vm792, 0, %v676
      %v800 = vsel %vm792, 0, %v683
      %v801 = vsel %vm792, 0, %v690
      %v802 = vsel %vm792, 0, %v697
      %v803 = vsel %vm792, 0, %v704
      %v804 = vsel %vm792, 0, %v711
      %v805 = vsel %vm792, 0, %v718
      %v806 = vsel %vm792, 0, %v725
      %v807 = vsel %vm792, 0, %v732
      %v808 = vsel %vm792, 0, %v739
      %v809 = vsel %vm792, 0, %v746
      %v810 = vsel %vm792, 0, %v753
      %v811 = vsel %vm792, %v631, 0
      %v812 = vsel %vm792, %v638, 0
      %v813 = vsel %vm792, %v645, 0
      %v814 = vsel %vm792, %v652, 0
      %v815 = vsel %vm792, %v659, 0
      %v816 = vsel %vm792, %v666, 0
      %v817 = vsel %vm792, %v673, 0
      %v818 = vsel %vm792, %v680, 0
      %v819 = vsel %vm792, %v687, 0
      %v820 = vsel %vm792, %v694, 0
      %v821 = vsel %vm792, %v701, 0
      %v822 = vsel %vm792, %v708, 0
      %v823 = vsel %vm792, %v715, 0
      %v824 = vsel %vm792, %v722, 0
      %v825 = vsel %vm792, %v729, 0
      %v826 = vsel %vm792, %v736, 0
      %v827 = vsel %vm792, %v743, 0
      %v828 = vsel %vm792, %v750, 0
      %vm829 = vsmask.f32 7424
      %v831 = vshrl.u32 %v793, 16
      %v833 = vshll.u32 %v793, 16
      %v835 = vrot.slane %v833, 1
      %v836 = vor.u32 %v831, %v835
      %v838 = vshll.u32 %v811, 16
      %v840 = vrot.slane %v838, 1
      %v841 = vsel %vm829, %v836, %v840
      %v843 = vshrl.u32 %v794, 16
      %v845 = vshll.u32 %v794, 16
      %v847 = vrot.slane %v845, 1
      %v848 = vor.u32 %v843, %v847
      %v850 = vshll.u32 %v812, 16
      %v852 = vrot.slane %v850, 1
      %v853 = vsel %vm829, %v848, %v852
      %v855 = vshrl.u32 %v795, 16
      %v857 = vshll.u32 %v795, 16
      %v859 = vrot.slane %v857, 1
      %v860 = vor.u32 %v855, %v859
      %v862 = vshll.u32 %v813, 16
      %v864 = vrot.slane %v862, 1
      %v865 = vsel %vm829, %v860, %v864
      %v867 = vshrl.u32 %v796, 16
      %v869 = vshll.u32 %v796, 16
      %v871 = vrot.slane %v869, 1
      %v872 = vor.u32 %v867, %v871
      %v874 = vshll.u32 %v814, 16
      %v876 = vrot.slane %v874, 1
      %v877 = vsel %vm829, %v872, %v876
      %v879 = vshrl.u32 %v797, 16
      %v881 = vshll.u32 %v797, 16
      %v883 = vrot.slane %v881, 1
      %v884 = vor.u32 %v879, %v883
      %v886 = vshll.u32 %v815, 16
      %v888 = vrot.slane %v886, 1
      %v889 = vsel %vm829, %v884, %v888
      %v891 = vshrl.u32 %v798, 16
      %v893 = vshll.u32 %v798, 16
      %v895 = vrot.slane %v893, 1
      %v896 = vor.u32 %v891, %v895
      %v898 = vshll.u32 %v816, 16
      %v900 = vrot.slane %v898, 1
      %v901 = vsel %vm829, %v896, %v900
      %v903 = vshrl.u32 %v799, 16
      %v905 = vshll.u32 %v799, 16
      %v907 = vrot.slane %v905, 1
      %v908 = vor.u32 %v903, %v907
      %v910 = vshll.u32 %v817, 16
      %v912 = vrot.slane %v910, 1
      %v913 = vsel %vm829, %v908, %v912
      %v915 = vshrl.u32 %v800, 16
      %v917 = vshll.u32 %v800, 16
      %v919 = vrot.slane %v917, 1
      %v920 = vor.u32 %v915, %v919
      %v922 = vshll.u32 %v818, 16
      %v924 = vrot.slane %v922, 1
      %v925 = vsel %vm829, %v920, %v924
      %v927 = vshrl.u32 %v801, 16
      %v929 = vshll.u32 %v801, 16
      %v931 = vrot.slane %v929, 1
      %v932 = vor.u32 %v927, %v931
      %v934 = vshll.u32 %v819, 16
      %v936 = vrot.slane %v934, 1
      %v937 = vsel %vm829, %v932, %v936
      %v939 = vshrl.u32 %v802, 16
      %v941 = vshll.u32 %v802, 16
      %v943 = vrot.slane %v941, 1
      %v944 = vor.u32 %v939, %v943
      %v946 = vshll.u32 %v820, 16
      %v948 = vrot.slane %v946, 1
      %v949 = vsel %vm829, %v944, %v948
      %v951 = vshrl.u32 %v803, 16
      %v953 = vshll.u32 %v803, 16
      %v955 = vrot.slane %v953, 1
      %v956 = vor.u32 %v951, %v955
      %v958 = vshll.u32 %v821, 16
      %v960 = vrot.slane %v958, 1
      %v961 = vsel %vm829, %v956, %v960
      %v963 = vshrl.u32 %v804, 16
      %v965 = vshll.u32 %v804, 16
      %v967 = vrot.slane %v965, 1
      %v968 = vor.u32 %v963, %v967
      %v970 = vshll.u32 %v822, 16
      %v972 = vrot.slane %v970, 1
      %v973 = vsel %vm829, %v968, %v972
      %v975 = vshrl.u32 %v805, 16
      %v977 = vshll.u32 %v805, 16
      %v979 = vrot.slane %v977, 1
      %v980 = vor.u32 %v975, %v979
      %v982 = vshll.u32 %v823, 16
      %v984 = vrot.slane %v982, 1
      %v985 = vsel %vm829, %v980, %v984
      %v987 = vshrl.u32 %v806, 16
      %v989 = vshll.u32 %v806, 16
      %v991 = vrot.slane %v989, 1
      %v992 = vor.u32 %v987, %v991
      %v994 = vshll.u32 %v824, 16
      %v996 = vrot.slane %v994, 1
      %v997 = vsel %vm829, %v992, %v996
      %v999 = vshrl.u32 %v807, 16
      %v1001 = vshll.u32 %v807, 16
      %v1003 = vrot.slane %v1001, 1
      %v1004 = vor.u32 %v999, %v1003
      %v1006 = vshll.u32 %v825, 16
      %v1008 = vrot.slane %v1006, 1
      %v1009 = vsel %vm829, %v1004, %v1008
      %v1011 = vshrl.u32 %v808, 16
      %v1013 = vshll.u32 %v808, 16
      %v1015 = vrot.slane %v1013, 1
      %v1016 = vor.u32 %v1011, %v1015
      %v1018 = vshll.u32 %v826, 16
      %v1020 = vrot.slane %v1018, 1
      %v1021 = vsel %vm829, %v1016, %v1020
      %vm1054 = vcmask 1046528
      %v1055 = vrot.slane %v793, 1
      %v1056 = vrot.slane %v811, 1
      %v1057 = vsel %vm1054, %v1055, %v1056
      %v1058 = vrot.slane %v794, 1
      %v1059 = vrot.slane %v812, 1
      %v1060 = vsel %vm1054, %v1058, %v1059
      %v1061 = vrot.slane %v795, 1
      %v1062 = vrot.slane %v813, 1
      %v1063 = vsel %vm1054, %v1061, %v1062
      %v1064 = vrot.slane %v796, 1
      %v1065 = vrot.slane %v814, 1
      %v1066 = vsel %vm1054, %v1064, %v1065
      %v1067 = vrot.slane %v797, 1
      %v1068 = vrot.slane %v815, 1
      %v1069 = vsel %vm1054, %v1067, %v1068
      %v1070 = vrot.slane %v798, 1
      %v1071 = vrot.slane %v816, 1
      %v1072 = vsel %vm1054, %v1070, %v1071
      %v1073 = vrot.slane %v799, 1
      %v1074 = vrot.slane %v817, 1
      %v1075 = vsel %vm1054, %v1073, %v1074
      %v1076 = vrot.slane %v800, 1
      %v1077 = vrot.slane %v818, 1
      %v1078 = vsel %vm1054, %v1076, %v1077
      %v1079 = vrot.slane %v801, 1
      %v1080 = vrot.slane %v819, 1
      %v1081 = vsel %vm1054, %v1079, %v1080
      %v1082 = vrot.slane %v802, 1
      %v1083 = vrot.slane %v820, 1
      %v1084 = vsel %vm1054, %v1082, %v1083
      %v1085 = vrot.slane %v803, 1
      %v1086 = vrot.slane %v821, 1
      %v1087 = vsel %vm1054, %v1085, %v1086
      %v1088 = vrot.slane %v804, 1
      %v1089 = vrot.slane %v822, 1
      %v1090 = vsel %vm1054, %v1088, %v1089
      %v1091 = vrot.slane %v805, 1
      %v1092 = vrot.slane %v823, 1
      %v1093 = vsel %vm1054, %v1091, %v1092
      %v1094 = vrot.slane %v806, 1
      %v1095 = vrot.slane %v824, 1
      %v1096 = vsel %vm1054, %v1094, %v1095
      %v1097 = vrot.slane %v807, 1
      %v1098 = vrot.slane %v825, 1
      %v1099 = vsel %vm1054, %v1097, %v1098
      %v1100 = vrot.slane %v808, 1
      %v1101 = vrot.slane %v826, 1
      %v1102 = vsel %vm1054, %v1100, %v1101
      %v1104 = vshrl.u32 %v809, 16
      %v1106 = vshll.u32 %v809, 16
      %v1108 = vrot.slane %v1106, 1
      %v1109 = vor.u32 %v1104, %v1108
      %v1111 = vshll.u32 %v827, 16
      %v1113 = vrot.slane %v1111, 1
      %v1114 = vsel %vm829, %v1109, %v1113
      %v1117 = vrot.slane %v809, 1
      %v1118 = vrot.slane %v827, 1
      %v1119 = vsel %vm1054, %v1117, %v1118
      %v1121 = vshrl.u32 %v810, 16
      %v1123 = vshll.u32 %v810, 16
      %v1125 = vrot.slane %v1123, 1
      %v1126 = vor.u32 %v1121, %v1125
      %v1128 = vshll.u32 %v828, 16
      %v1130 = vrot.slane %v1128, 1
      %v1131 = vsel %vm829, %v1126, %v1130
      %v1134 = vrot.slane %v810, 1
      %v1135 = vrot.slane %v828, 1
      %v1136 = vsel %vm1054, %v1134, %v1135
      %1137 = vrot.lane.b32.xlu0 %v841, 8
      %v1138 = vpop.permute.xlu0 %1137
      %1139 = vrot.lane.b32.xlu0 %v853, 8
      %v1140 = vpop.permute.xlu0 %1139
      %1141 = vrot.lane.b32.xlu0 %v865, 8
      %v1142 = vpop.permute.xlu0 %1141
      %1143 = vrot.lane.b32.xlu0 %v877, 8
      %v1144 = vpop.permute.xlu0 %1143
      %1145 = vrot.lane.b32.xlu0 %v889, 8
      %v1146 = vpop.permute.xlu0 %1145
      %1147 = vrot.lane.b32.xlu0 %v901, 8
      %v1148 = vpop.permute.xlu0 %1147
      %1149 = vrot.lane.b32.xlu0 %v913, 8
      %v1150 = vpop.permute.xlu0 %1149
      %1151 = vrot.lane.b32.xlu0 %v925, 8
      %v1152 = vpop.permute.xlu0 %1151
      %1153 = vrot.lane.b32.xlu0 %v937, 8
      %v1154 = vpop.permute.xlu0 %1153
      %1155 = vrot.lane.b32.xlu0 %v949, 8
      %v1156 = vpop.permute.xlu0 %1155
      %1157 = vrot.lane.b32.xlu0 %v961, 8
      %v1158 = vpop.permute.xlu0 %1157
      %1159 = vrot.lane.b32.xlu0 %v973, 8
      %v1160 = vpop.permute.xlu0 %1159
      %1161 = vrot.lane.b32.xlu0 %v985, 8
      %v1162 = vpop.permute.xlu0 %1161
      %1163 = vrot.lane.b32.xlu0 %v997, 8
      %v1164 = vpop.permute.xlu0 %1163
      %1165 = vrot.lane.b32.xlu0 %v1009, 8
      %v1166 = vpop.permute.xlu0 %1165
      %1167 = vrot.lane.b32.xlu0 %v1021, 8
      %v1168 = vpop.permute.xlu0 %1167
      %1169 = vrot.lane.b32.xlu0 %v1057, 16
      %v1170 = vpop.permute.xlu0 %1169
      %1171 = vrot.lane.b32.xlu0 %v1060, 16
      %v1172 = vpop.permute.xlu0 %1171
      %1173 = vrot.lane.b32.xlu0 %v1063, 16
      %v1174 = vpop.permute.xlu0 %1173
      %1175 = vrot.lane.b32.xlu0 %v1066, 16
      %v1176 = vpop.permute.xlu0 %1175
      %1177 = vrot.lane.b32.xlu0 %v1069, 16
      %v1178 = vpop.permute.xlu0 %1177
      %1179 = vrot.lane.b32.xlu0 %v1072, 16
      %v1180 = vpop.permute.xlu0 %1179
      %1181 = vrot.lane.b32.xlu0 %v1075, 16
      %v1182 = vpop.permute.xlu0 %1181
      %1183 = vrot.lane.b32.xlu0 %v1078, 16
      %v1184 = vpop.permute.xlu0 %1183
      %1185 = vrot.lane.b32.xlu0 %v1081, 16
      %v1186 = vpop.permute.xlu0 %1185
      %1187 = vrot.lane.b32.xlu0 %v1084, 16
      %v1188 = vpop.permute.xlu0 %1187
      %1189 = vrot.lane.b32.xlu0 %v1087, 16
      %v1190 = vpop.permute.xlu0 %1189
      %1191 = vrot.lane.b32.xlu0 %v1090, 16
      %v1192 = vpop.permute.xlu0 %1191
      %1193 = vrot.lane.b32.xlu0 %v1093, 16
      %v1194 = vpop.permute.xlu0 %1193
      %1195 = vrot.lane.b32.xlu0 %v1096, 16
      %v1196 = vpop.permute.xlu0 %1195
      %1197 = vrot.lane.b32.xlu0 %v1099, 16
      %v1198 = vpop.permute.xlu0 %1197
      %1199 = vrot.lane.b32.xlu0 %v1102, 16
      %v1200 = vpop.permute.xlu0 %1199
      %1201 = vrot.lane.b32.xlu0 %v794, 24
      %v1202 = vpop.permute.xlu0 %1201
      %1203 = vrot.lane.b32.xlu0 %v795, 24
      %v1204 = vpop.permute.xlu0 %1203
      %1205 = vrot.lane.b32.xlu0 %v796, 24
      %v1206 = vpop.permute.xlu0 %1205
      %1207 = vrot.lane.b32.xlu0 %v797, 24
      %v1208 = vpop.permute.xlu0 %1207
      %1209 = vrot.lane.b32.xlu0 %v798, 24
      %v1210 = vpop.permute.xlu0 %1209
      %1211 = vrot.lane.b32.xlu0 %v799, 24
      %v1212 = vpop.permute.xlu0 %1211
      %1213 = vrot.lane.b32.xlu0 %v800, 24
      %v1214 = vpop.permute.xlu0 %1213
      %1215 = vrot.lane.b32.xlu0 %v801, 24
      %v1216 = vpop.permute.xlu0 %1215
      %1217 = vrot.lane.b32.xlu0 %v802, 24
      %v1218 = vpop.permute.xlu0 %1217
      %1219 = vrot.lane.b32.xlu0 %v803, 24
      %v1220 = vpop.permute.xlu0 %1219
      %1221 = vrot.lane.b32.xlu0 %v804, 24
      %v1222 = vpop.permute.xlu0 %1221
      %1223 = vrot.lane.b32.xlu0 %v805, 24
      %v1224 = vpop.permute.xlu0 %1223
      %1225 = vrot.lane.b32.xlu0 %v806, 24
      %v1226 = vpop.permute.xlu0 %1225
      %1227 = vrot.lane.b32.xlu0 %v807, 24
      %v1228 = vpop.permute.xlu0 %1227
      %1229 = vrot.lane.b32.xlu0 %v808, 24
      %v1230 = vpop.permute.xlu0 %1229
      %1231 = vrot.lane.b32.xlu0 %v809, 24
      %v1232 = vpop.permute.xlu0 %1231
      %1233 = vrot.lane.b32.xlu0 %v853, 32
      %v1234 = vpop.permute.xlu0 %1233
      %1235 = vrot.lane.b32.xlu0 %v865, 32
      %v1236 = vpop.permute.xlu0 %1235
      %1237 = vrot.lane.b32.xlu0 %v877, 32
      %v1238 = vpop.permute.xlu0 %1237
      %1239 = vrot.lane.b32.xlu0 %v889, 32
      %v1240 = vpop.permute.xlu0 %1239
      %1241 = vrot.lane.b32.xlu0 %v901, 32
      %v1242 = vpop.permute.xlu0 %1241
      %1243 = vrot.lane.b32.xlu0 %v913, 32
      %v1244 = vpop.permute.xlu0 %1243
      %1245 = vrot.lane.b32.xlu0 %v925, 32
      %v1246 = vpop.permute.xlu0 %1245
      %1247 = vrot.lane.b32.xlu0 %v937, 32
      %v1248 = vpop.permute.xlu0 %1247
      %1249 = vrot.lane.b32.xlu0 %v949, 32
      %v1250 = vpop.permute.xlu0 %1249
      %1251 = vrot.lane.b32.xlu0 %v961, 32
      %v1252 = vpop.permute.xlu0 %1251
      %1253 = vrot.lane.b32.xlu0 %v973, 32
      %v1254 = vpop.permute.xlu0 %1253
      %1255 = vrot.lane.b32.xlu0 %v985, 32
      %v1256 = vpop.permute.xlu0 %1255
      %1257 = vrot.lane.b32.xlu0 %v997, 32
      %v1258 = vpop.permute.xlu0 %1257
      %1259 = vrot.lane.b32.xlu0 %v1009, 32
      %v1260 = vpop.permute.xlu0 %1259
      %1261 = vrot.lane.b32.xlu0 %v1021, 32
      %v1262 = vpop.permute.xlu0 %1261
      %1263 = vrot.lane.b32.xlu0 %v1114, 32
      %v1264 = vpop.permute.xlu0 %1263
      %1265 = vrot.lane.b32.xlu0 %v1060, 40
      %v1266 = vpop.permute.xlu0 %1265
      %1267 = vrot.lane.b32.xlu0 %v1063, 40
      %v1268 = vpop.permute.xlu0 %1267
      %1269 = vrot.lane.b32.xlu0 %v1066, 40
      %v1270 = vpop.permute.xlu0 %1269
      %1271 = vrot.lane.b32.xlu0 %v1069, 40
      %v1272 = vpop.permute.xlu0 %1271
      %1273 = vrot.lane.b32.xlu0 %v1072, 40
      %v1274 = vpop.permute.xlu0 %1273
      %1275 = vrot.lane.b32.xlu0 %v1075, 40
      %v1276 = vpop.permute.xlu0 %1275
      %1277 = vrot.lane.b32.xlu0 %v1078, 40
      %v1278 = vpop.permute.xlu0 %1277
      %1279 = vrot.lane.b32.xlu0 %v1081, 40
      %v1280 = vpop.permute.xlu0 %1279
      %1281 = vrot.lane.b32.xlu0 %v1084, 40
      %v1282 = vpop.permute.xlu0 %1281
      %1283 = vrot.lane.b32.xlu0 %v1087, 40
      %v1284 = vpop.permute.xlu0 %1283
      %1285 = vrot.lane.b32.xlu0 %v1090, 40
      %v1286 = vpop.permute.xlu0 %1285
      %1287 = vrot.lane.b32.xlu0 %v1093, 40
      %v1288 = vpop.permute.xlu0 %1287
      %1289 = vrot.lane.b32.xlu0 %v1096, 40
      %v1290 = vpop.permute.xlu0 %1289
      %1291 = vrot.lane.b32.xlu0 %v1099, 40
      %v1292 = vpop.permute.xlu0 %1291
      %1293 = vrot.lane.b32.xlu0 %v1102, 40
      %v1294 = vpop.permute.xlu0 %1293
      %1295 = vrot.lane.b32.xlu0 %v1119, 40
      %v1296 = vpop.permute.xlu0 %1295
      %1297 = vrot.lane.b32.xlu0 %v795, 48
      %v1298 = vpop.permute.xlu0 %1297
      %1299 = vrot.lane.b32.xlu0 %v796, 48
      %v1300 = vpop.permute.xlu0 %1299
      %1301 = vrot.lane.b32.xlu0 %v797, 48
      %v1302 = vpop.permute.xlu0 %1301
      %1303 = vrot.lane.b32.xlu0 %v798, 48
      %v1304 = vpop.permute.xlu0 %1303
      %1305 = vrot.lane.b32.xlu0 %v799, 48
      %v1306 = vpop.permute.xlu0 %1305
      %1307 = vrot.lane.b32.xlu0 %v800, 48
      %v1308 = vpop.permute.xlu0 %1307
      %1309 = vrot.lane.b32.xlu0 %v801, 48
      %v1310 = vpop.permute.xlu0 %1309
      %1311 = vrot.lane.b32.xlu0 %v802, 48
      %v1312 = vpop.permute.xlu0 %1311
      %1313 = vrot.lane.b32.xlu0 %v803, 48
      %v1314 = vpop.permute.xlu0 %1313
      %1315 = vrot.lane.b32.xlu0 %v804, 48
      %v1316 = vpop.permute.xlu0 %1315
      %1317 = vrot.lane.b32.xlu0 %v805, 48
      %v1318 = vpop.permute.xlu0 %1317
      %1319 = vrot.lane.b32.xlu0 %v806, 48
      %v1320 = vpop.permute.xlu0 %1319
      %1321 = vrot.lane.b32.xlu0 %v807, 48
      %v1322 = vpop.permute.xlu0 %1321
      %1323 = vrot.lane.b32.xlu0 %v808, 48
      %v1324 = vpop.permute.xlu0 %1323
      %1325 = vrot.lane.b32.xlu0 %v809, 48
      %v1326 = vpop.permute.xlu0 %1325
      %1327 = vrot.lane.b32.xlu0 %v810, 48
      %v1328 = vpop.permute.xlu0 %1327
      %1329 = vrot.lane.b32.xlu0 %v865, 56
      %v1330 = vpop.permute.xlu0 %1329
      %1331 = vrot.lane.b32.xlu0 %v877, 56
      %v1332 = vpop.permute.xlu0 %1331
      %1333 = vrot.lane.b32.xlu0 %v889, 56
      %v1334 = vpop.permute.xlu0 %1333
      %1335 = vrot.lane.b32.xlu0 %v901, 56
      %v1336 = vpop.permute.xlu0 %1335
      %1337 = vrot.lane.b32.xlu0 %v913, 56
      %v1338 = vpop.permute.xlu0 %1337
      %1339 = vrot.lane.b32.xlu0 %v925, 56
      %v1340 = vpop.permute.xlu0 %1339
      %1341 = vrot.lane.b32.xlu0 %v937, 56
      %v1342 = vpop.permute.xlu0 %1341
      %1343 = vrot.lane.b32.xlu0 %v949, 56
      %v1344 = vpop.permute.xlu0 %1343
      %1345 = vrot.lane.b32.xlu0 %v961, 56
      %v1346 = vpop.permute.xlu0 %1345
      %1347 = vrot.lane.b32.xlu0 %v973, 56
      %v1348 = vpop.permute.xlu0 %1347
      %1349 = vrot.lane.b32.xlu0 %v985, 56
      %v1350 = vpop.permute.xlu0 %1349
      %1351 = vrot.lane.b32.xlu0 %v997, 56
      %v1352 = vpop.permute.xlu0 %1351
      %1353 = vrot.lane.b32.xlu0 %v1009, 56
      %v1354 = vpop.permute.xlu0 %1353
      %1355 = vrot.lane.b32.xlu0 %v1021, 56
      %v1356 = vpop.permute.xlu0 %1355
      %1357 = vrot.lane.b32.xlu0 %v1114, 56
      %v1358 = vpop.permute.xlu0 %1357
      %1359 = vrot.lane.b32.xlu0 %v1131, 56
      %v1360 = vpop.permute.xlu0 %1359
      %1361 = vrot.lane.b32.xlu0 %v1063, 64
      %v1362 = vpop.permute.xlu0 %1361
      %1363 = vrot.lane.b32.xlu0 %v1066, 64
      %v1364 = vpop.permute.xlu0 %1363
      %1365 = vrot.lane.b32.xlu0 %v1069, 64
      %v1366 = vpop.permute.xlu0 %1365
      %1367 = vrot.lane.b32.xlu0 %v1072, 64
      %v1368 = vpop.permute.xlu0 %1367
      %1369 = vrot.lane.b32.xlu0 %v1075, 64
      %v1370 = vpop.permute.xlu0 %1369
      %1371 = vrot.lane.b32.xlu0 %v1078, 64
      %v1372 = vpop.permute.xlu0 %1371
      %1373 = vrot.lane.b32.xlu0 %v1081, 64
      %v1374 = vpop.permute.xlu0 %1373
      %1375 = vrot.lane.b32.xlu0 %v1084, 64
      %v1376 = vpop.permute.xlu0 %1375
      %1377 = vrot.lane.b32.xlu0 %v1087, 64
      %v1378 = vpop.permute.xlu0 %1377
      %1379 = vrot.lane.b32.xlu0 %v1090, 64
      %v1380 = vpop.permute.xlu0 %1379
      %1381 = vrot.lane.b32.xlu0 %v1093, 64
      %v1382 = vpop.permute.xlu0 %1381
      %1383 = vrot.lane.b32.xlu0 %v1096, 64
      %v1384 = vpop.permute.xlu0 %1383
      %1385 = vrot.lane.b32.xlu0 %v1099, 64
      %v1386 = vpop.permute.xlu0 %1385
      %1387 = vrot.lane.b32.xlu0 %v1102, 64
      %v1388 = vpop.permute.xlu0 %1387
      %1389 = vrot.lane.b32.xlu0 %v1119, 64
      %v1390 = vpop.permute.xlu0 %1389
      %1391 = vrot.lane.b32.xlu0 %v1136, 64
      %v1392 = vpop.permute.xlu0 %1391
      %vm1393 = vcmask 64512
      %v1395 = vsel %vm1393, %v793, %v1138
      %v1397 = vsel %vm1393, %v794, %v1140
      %v1399 = vsel %vm1393, %v795, %v1142
      %v1401 = vsel %vm1393, %v796, %v1144
      %v1403 = vsel %vm1393, %v797, %v1146
      %v1405 = vsel %vm1393, %v798, %v1148
      %v1407 = vsel %vm1393, %v799, %v1150
      %v1409 = vsel %vm1393, %v800, %v1152
      %v1411 = vsel %vm1393, %v801, %v1154
      %v1413 = vsel %vm1393, %v802, %v1156
      %v1415 = vsel %vm1393, %v803, %v1158
      %v1417 = vsel %vm1393, %v804, %v1160
      %v1419 = vsel %vm1393, %v805, %v1162
      %v1421 = vsel %vm1393, %v806, %v1164
      %v1423 = vsel %vm1393, %v807, %v1166
      %v1425 = vsel %vm1393, %v808, %v1168
      %vm1426 = vcmask 130048
      %v1428 = vsel %vm1426, %v1395, %v1170
      %v1430 = vsel %vm1426, %v1397, %v1172
      %v1432 = vsel %vm1426, %v1399, %v1174
      %v1434 = vsel %vm1426, %v1401, %v1176
      %v1436 = vsel %vm1426, %v1403, %v1178
      %v1438 = vsel %vm1426, %v1405, %v1180
      %v1440 = vsel %vm1426, %v1407, %v1182
      %v1442 = vsel %vm1426, %v1409, %v1184
      %v1444 = vsel %vm1426, %v1411, %v1186
      %v1446 = vsel %vm1426, %v1413, %v1188
      %v1448 = vsel %vm1426, %v1415, %v1190
      %v1450 = vsel %vm1426, %v1417, %v1192
      %v1452 = vsel %vm1426, %v1419, %v1194
      %v1454 = vsel %vm1426, %v1421, %v1196
      %v1456 = vsel %vm1426, %v1423, %v1198
      %v1458 = vsel %vm1426, %v1425, %v1200
      %vm1459 = vcmask 195584
      %v1461 = vsel %vm1459, %v1428, %v1202
      %v1463 = vsel %vm1459, %v1430, %v1204
      %v1465 = vsel %vm1459, %v1432, %v1206
      %v1467 = vsel %vm1459, %v1434, %v1208
      %v1469 = vsel %vm1459, %v1436, %v1210
      %v1471 = vsel %vm1459, %v1438, %v1212
      %v1473 = vsel %vm1459, %v1440, %v1214
      %v1475 = vsel %vm1459, %v1442, %v1216
      %v1477 = vsel %vm1459, %v1444, %v1218
      %v1479 = vsel %vm1459, %v1446, %v1220
      %v1481 = vsel %vm1459, %v1448, %v1222
      %v1483 = vsel %vm1459, %v1450, %v1224
      %v1485 = vsel %vm1459, %v1452, %v1226
      %v1487 = vsel %vm1459, %v1454, %v1228
      %v1489 = vsel %vm1459, %v1456, %v1230
      %v1491 = vsel %vm1459, %v1458, %v1232
      %vm1492 = vcmask 261120
      %v1494 = vsel %vm1492, %v1461, %v1234
      %v1496 = vsel %vm1492, %v1463, %v1236
      %v1498 = vsel %vm1492, %v1465, %v1238
      %v1500 = vsel %vm1492, %v1467, %v1240
      %v1502 = vsel %vm1492, %v1469, %v1242
      %v1504 = vsel %vm1492, %v1471, %v1244
      %v1506 = vsel %vm1492, %v1473, %v1246
      %v1508 = vsel %vm1492, %v1475, %v1248
      %v1510 = vsel %vm1492, %v1477, %v1250
      %v1512 = vsel %vm1492, %v1479, %v1252
      %v1514 = vsel %vm1492, %v1481, %v1254
      %v1516 = vsel %vm1492, %v1483, %v1256
      %v1518 = vsel %vm1492, %v1485, %v1258
      %v1520 = vsel %vm1492, %v1487, %v1260
      %v1522 = vsel %vm1492, %v1489, %v1262
      %v1524 = vsel %vm1492, %v1491, %v1264
      %vm1525 = vcmask 326656
      %v1527 = vsel %vm1525, %v1494, %v1266
      %v1529 = vsel %vm1525, %v1496, %v1268
      %v1531 = vsel %vm1525, %v1498, %v1270
      %v1533 = vsel %vm1525, %v1500, %v1272
      %v1535 = vsel %vm1525, %v1502, %v1274
      %v1537 = vsel %vm1525, %v1504, %v1276
      %v1539 = vsel %vm1525, %v1506, %v1278
      %v1541 = vsel %vm1525, %v1508, %v1280
      %v1543 = vsel %vm1525, %v1510, %v1282
      %v1545 = vsel %vm1525, %v1512, %v1284
      %v1547 = vsel %vm1525, %v1514, %v1286
      %v1549 = vsel %vm1525, %v1516, %v1288
      %v1551 = vsel %vm1525, %v1518, %v1290
      %v1553 = vsel %vm1525, %v1520, %v1292
      %v1555 = vsel %vm1525, %v1522, %v1294
      %v1557 = vsel %vm1525, %v1524, %v1296
      %vm1558 = vcmask 392192
      %v1560 = vsel %vm1558, %v1527, %v1298
      %v1562 = vsel %vm1558, %v1529, %v1300
      %v1564 = vsel %vm1558, %v1531, %v1302
      %v1566 = vsel %vm1558, %v1533, %v1304
      %v1568 = vsel %vm1558, %v1535, %v1306
      %v1570 = vsel %vm1558, %v1537, %v1308
      %v1572 = vsel %vm1558, %v1539, %v1310
      %v1574 = vsel %vm1558, %v1541, %v1312
      %v1576 = vsel %vm1558, %v1543, %v1314
      %v1578 = vsel %vm1558, %v1545, %v1316
      %v1580 = vsel %vm1558, %v1547, %v1318
      %v1582 = vsel %vm1558, %v1549, %v1320
      %v1584 = vsel %vm1558, %v1551, %v1322
      %v1586 = vsel %vm1558, %v1553, %v1324
      %v1588 = vsel %vm1558, %v1555, %v1326
      %v1590 = vsel %vm1558, %v1557, %v1328
      %vm1591 = vcmask 457728
      %v1593 = vsel %vm1591, %v1560, %v1330
      %v1595 = vsel %vm1591, %v1562, %v1332
      %v1597 = vsel %vm1591, %v1564, %v1334
      %v1599 = vsel %vm1591, %v1566, %v1336
      %v1601 = vsel %vm1591, %v1568, %v1338
      %v1603 = vsel %vm1591, %v1570, %v1340
      %v1605 = vsel %vm1591, %v1572, %v1342
      %v1607 = vsel %vm1591, %v1574, %v1344
      %v1609 = vsel %vm1591, %v1576, %v1346
      %v1611 = vsel %vm1591, %v1578, %v1348
      %v1613 = vsel %vm1591, %v1580, %v1350
      %v1615 = vsel %vm1591, %v1582, %v1352
      %v1617 = vsel %vm1591, %v1584, %v1354
      %v1619 = vsel %vm1591, %v1586, %v1356
      %v1621 = vsel %vm1591, %v1588, %v1358
      %v1623 = vsel %vm1591, %v1590, %v1360
      %vm1624 = vcmask 523264
      %v1626 = vsel %vm1624, %v1593, %v1362
      %v1628 = vsel %vm1624, %v1595, %v1364
      %v1630 = vsel %vm1624, %v1597, %v1366
      %v1632 = vsel %vm1624, %v1599, %v1368
      %v1634 = vsel %vm1624, %v1601, %v1370
      %v1636 = vsel %vm1624, %v1603, %v1372
      %v1638 = vsel %vm1624, %v1605, %v1374
      %v1640 = vsel %vm1624, %v1607, %v1376
      %v1642 = vsel %vm1624, %v1609, %v1378
      %v1644 = vsel %vm1624, %v1611, %v1380
      %v1646 = vsel %vm1624, %v1613, %v1382
      %v1648 = vsel %vm1624, %v1615, %v1384
      %v1650 = vsel %vm1624, %v1617, %v1386
      %v1652 = vsel %vm1624, %v1619, %v1388
      %v1654 = vsel %vm1624, %v1621, %v1390
      %v1656 = vsel %vm1624, %v1623, %v1392
      %v1657 = vld [vmem:[%s3] sm:$0xf]
      %v1658 = vld [vmem:[%s3 + $0x4] sm:$0xf]
      %v1659 = vld [vmem:[%s3 + $0x8] sm:$0xf]
      %v1660 = vld [vmem:[%s3 + $0xc] sm:$0xf]
      %v1661 = vld [vmem:[%s3 + $0x10] sm:$0xf]
      %v1662 = vld [vmem:[%s3 + $0x14] sm:$0xf]
      %v1663 = vld [vmem:[%s3 + $0x18] sm:$0xf]
      %v1664 = vld [vmem:[%s3 + $0x1c] sm:$0xf]
      %v1665 = vld [vmem:[%s3 + $0x20] sm:$0xf]
      %v1675 = vunpack.c.l.b16 %v1657
      %v1676 = vunpack.c.l.b16 %v1658
      %v1677 = vunpack.c.l.b16 %v1659
      %v1678 = vunpack.c.l.b16 %v1660
      %v1679 = vunpack.c.l.b16 %v1661
      %v1680 = vunpack.c.l.b16 %v1662
      %v1681 = vunpack.c.l.b16 %v1663
      %v1682 = vunpack.c.l.b16 %v1664
      %v1683 = vunpack.c.l.b16 %v1665
      %v1684 = vpack.c.b16 %v1676, %v1675
      %v1685 = vpack.c.b16 %v1678, %v1677
      %v1686 = vpack.c.b16 %v1680, %v1679
      %v1687 = vpack.c.b16 %v1682, %v1681
      %v1688 = vpack.c.b16 %v1683, %v1683
      %vm1693 = vcmask 588800
      %v1694 = vsel %vm1693, %v1626, 0
      %v1696 = vsel %vm1693, %v1628, 0
      %v1698 = vsel %vm1693, %v1630, 0
      %v1700 = vsel %vm1693, %v1632, 0
      %v1702 = vsel %vm1693, %v1634, 0
      %v1704 = vsel %vm1693, %v1636, 0
      %v1706 = vsel %vm1693, %v1638, 0
      %v1708 = vsel %vm1693, %v1640, 0
      %v1710 = vsel %vm1693, %v1642, 0
      %v1712 = vsel %vm1693, %v1644, 0
      %v1714 = vsel %vm1693, %v1646, 0
      %v1716 = vsel %vm1693, %v1648, 0
      %v1718 = vsel %vm1693, %v1650, 0
      %v1720 = vsel %vm1693, %v1652, 0
      %v1722 = vsel %vm1693, %v1654, 0
      %v1724 = vsel %vm1693, %v1656, 0
      %vm1726 = vcmask 1043456
      %v1728 = vsel %vm1726, %v1688, 0
      %1730 = vmatprep.subr.bf16.mxu0 0
      %1731 = vmatpush1.bf16.msra.mxu0 %v1684
      %1732 = vmatprep.subr.bf16.mxu0 0
      %1733 = vmatpush1.bf16.msra.mxu0 %v1685
      %1734 = vmatprep.subr.bf16.mxu0 0
      %1735 = vmatpush1.bf16.msra.mxu0 %v1686
      %1736 = vmatprep.subr.bf16.mxu0 0
      %1737 = vmatpush1.bf16.msra.mxu0 %v1687
      %1738 = vmatprep.subr.bf16.mxu0 0
      %1739 = vmatpush1.bf16.msra.mxu0 %v1728
      %1740 = vmatprep.subr.bf16.mxu0 0
      %1741 = vmatpush1.bf16.msra.mxu0 0
      %1742 = vmatprep.subr.bf16.mxu0 0
      %1743 = vmatpush1.bf16.msra.mxu0 0
      %1744 = vmatprep.subr.bf16.mxu0 0
      %1745 = vmatpush1.bf16.msra.mxu0 0
      %1746 = vmatprep.subr.bf16.mxu0 0
      %1747 = vmatpush1.bf16.msra.mxu0 0
      %1748 = vmatprep.subr.bf16.mxu0 0
      %1749 = vmatpush1.bf16.msra.mxu0 0
      %1750 = vmatprep.subr.bf16.mxu0 0
      %1751 = vmatpush1.bf16.msra.mxu0 0
      %1752 = vmatprep.subr.bf16.mxu0 0
      %1753 = vmatpush1.bf16.msra.mxu0 0
      %1754 = vmatprep.subr.bf16.mxu0 0
      %1755 = vmatpush1.bf16.msra.mxu0 0
      %1756 = vmatprep.subr.bf16.mxu0 0
      %1757 = vmatpush1.bf16.msra.mxu0 0
      %1758 = vmatprep.subr.bf16.mxu0 0
      %1759 = vmatpush1.bf16.msra.mxu0 0
      %1760 = vmatprep.subr.bf16.mxu0 0
      %1761 = vmatpush1.bf16.msra.mxu0 0
      %1762 = vmatprep.mubr.bf16.mxu0 0
      %1763 = vmatmul.mubr.bf16.gmra.mrb[0].mxu0 %v1694
      %v1764 = vpop.f32.mrb[0].mxu0
      %v1765 = vadd.f32 0.0, %v1764
      %v1766 = vpop.f32.mrb[0].mxu0
      %v1767 = vpop.f32.mrb[0].mxu0
      %v1768 = vadd.f32 0.0, %v1767
      %v1769 = vpop.f32.mrb[0].mxu0
      %1770 = vmatprep.mubr.bf16.mxu0 0
      %1771 = vmatmul.mubr.bf16.gmra.mrb[0].mxu0 %v1696
      %v1772 = vpop.f32.mrb[0].mxu0
      %v1773 = vadd.f32 0.0, %v1772
      %v1774 = vpop.f32.mrb[0].mxu0
      %v1775 = vpop.f32.mrb[0].mxu0
      %v1776 = vadd.f32 0.0, %v1775
      %v1777 = vpop.f32.mrb[0].mxu0
      %1778 = vmatprep.mubr.bf16.mxu0 0
      %1779 = vmatmul.mubr.bf16.gmra.mrb[0].mxu0 %v1698
      %v1780 = vpop.f32.mrb[0].mxu0
      %v1781 = vadd.f32 0.0, %v1780
      %v1782 = vpop.f32.mrb[0].mxu0
      %v1783 = vpop.f32.mrb[0].mxu0
      %v1784 = vadd.f32 0.0, %v1783
      %v1785 = vpop.f32.mrb[0].mxu0
      %1786 = vmatprep.mubr.bf16.mxu0 0
      %1787 = vmatmul.mubr.bf16.gmra.mrb[0].mxu0 %v1700
      %v1788 = vpop.f32.mrb[0].mxu0
      %v1789 = vadd.f32 0.0, %v1788
      %v1790 = vpop.f32.mrb[0].mxu0
      %v1791 = vpop.f32.mrb[0].mxu0
      %v1792 = vadd.f32 0.0, %v1791
      %v1793 = vpop.f32.mrb[0].mxu0
      %1794 = vmatprep.mubr.bf16.mxu0 0
      %1795 = vmatmul.mubr.bf16.gmra.mrb[0].mxu0 %v1702
      %v1796 = vpop.f32.mrb[0].mxu0
      %v1797 = vadd.f32 0.0, %v1796
      %v1798 = vpop.f32.mrb[0].mxu0
      %v1799 = vpop.f32.mrb[0].mxu0
      %v1800 = vadd.f32 0.0, %v1799
      %v1801 = vpop.f32.mrb[0].mxu0
      %1802 = vmatprep.mubr.bf16.mxu0 0
      %1803 = vmatmul.mubr.bf16.gmra.mrb[0].mxu0 %v1704
      %v1804 = vpop.f32.mrb[0].mxu0
      %v1805 = vadd.f32 0.0, %v1804
      %v1806 = vpop.f32.mrb[0].mxu0
      %v1807 = vpop.f32.mrb[0].mxu0
      %v1808 = vadd.f32 0.0, %v1807
      %v1809 = vpop.f32.mrb[0].mxu0
      %1810 = vmatprep.mubr.bf16.mxu0 0
      %1811 = vmatmul.mubr.bf16.gmra.mrb[0].mxu0 %v1706
      %v1812 = vpop.f32.mrb[0].mxu0
      %v1813 = vadd.f32 0.0, %v1812
      %v1814 = vpop.f32.mrb[0].mxu0
      %v1815 = vpop.f32.mrb[0].mxu0
      %v1816 = vadd.f32 0.0, %v1815
      %v1817 = vpop.f32.mrb[0].mxu0
      %1818 = vmatprep.mubr.bf16.mxu0 0
      %1819 = vmatmul.mubr.bf16.gmra.mrb[0].mxu0 %v1708
      %v1820 = vpop.f32.mrb[0].mxu0
      %v1821 = vadd.f32 0.0, %v1820
      %v1822 = vpop.f32.mrb[0].mxu0
      %v1823 = vpop.f32.mrb[0].mxu0
      %v1824 = vadd.f32 0.0, %v1823
      %v1825 = vpop.f32.mrb[0].mxu0
      %1826 = vmatprep.mubr.bf16.mxu0 0
      %1827 = vmatmul.mubr.bf16.gmra.mrb[0].mxu0 %v1710
      %v1828 = vpop.f32.mrb[0].mxu0
      %v1829 = vadd.f32 0.0, %v1828
      %v1830 = vpop.f32.mrb[0].mxu0
      %v1831 = vpop.f32.mrb[0].mxu0
      %v1832 = vadd.f32 0.0, %v1831
      %v1833 = vpop.f32.mrb[0].mxu0
      %1834 = vmatprep.mubr.bf16.mxu0 0
      %1835 = vmatmul.mubr.bf16.gmra.mrb[0].mxu0 %v1712
      %v1836 = vpop.f32.mrb[0].mxu0
      %v1837 = vadd.f32 0.0, %v1836
      %v1838 = vpop.f32.mrb[0].mxu0
      %v1839 = vpop.f32.mrb[0].mxu0
      %v1840 = vadd.f32 0.0, %v1839
      %v1841 = vpop.f32.mrb[0].mxu0
      %1842 = vmatprep.mubr.bf16.mxu0 0
      %1843 = vmatmul.mubr.bf16.gmra.mrb[0].mxu0 %v1714
      %v1844 = vpop.f32.mrb[0].mxu0
      %v1845 = vadd.f32 0.0, %v1844
      %v1846 = vpop.f32.mrb[0].mxu0
      %v1847 = vpop.f32.mrb[0].mxu0
      %v1848 = vadd.f32 0.0, %v1847
      %v1849 = vpop.f32.mrb[0].mxu0
      %1850 = vmatprep.mubr.bf16.mxu0 0
      %1851 = vmatmul.mubr.bf16.gmra.mrb[0].mxu0 %v1716
      %v1852 = vpop.f32.mrb[0].mxu0
      %v1853 = vadd.f32 0.0, %v1852
      %v1854 = vpop.f32.mrb[0].mxu0
      %v1855 = vpop.f32.mrb[0].mxu0
      %v1856 = vadd.f32 0.0, %v1855
      %v1857 = vpop.f32.mrb[0].mxu0
      %1858 = vmatprep.mubr.bf16.mxu0 0
      %1859 = vmatmul.mubr.bf16.gmra.mrb[0].mxu0 %v1718
      %v1860 = vpop.f32.mrb[0].mxu0
      %v1861 = vadd.f32 0.0, %v1860
      %v1862 = vpop.f32.mrb[0].mxu0
      %v1863 = vpop.f32.mrb[0].mxu0
      %v1864 = vadd.f32 0.0, %v1863
      %v1865 = vpop.f32.mrb[0].mxu0
      %1866 = vmatprep.mubr.bf16.mxu0 0
      %1867 = vmatmul.mubr.bf16.gmra.mrb[0].mxu0 %v1720
      %v1868 = vpop.f32.mrb[0].mxu0
      %v1869 = vadd.f32 0.0, %v1868
      %v1870 = vpop.f32.mrb[0].mxu0
      %v1871 = vpop.f32.mrb[0].mxu0
      %v1872 = vadd.f32 0.0, %v1871
      %v1873 = vpop.f32.mrb[0].mxu0
      %1874 = vmatprep.mubr.bf16.mxu0 0
      %1875 = vmatmul.mubr.bf16.gmra.mrb[0].mxu0 %v1722
      %v1876 = vpop.f32.mrb[0].mxu0
      %v1877 = vadd.f32 0.0, %v1876
      %v1878 = vpop.f32.mrb[0].mxu0
      %v1879 = vpop.f32.mrb[0].mxu0
      %v1880 = vadd.f32 0.0, %v1879
      %v1881 = vpop.f32.mrb[0].mxu0
      %1882 = vmatprep.mubr.bf16.mxu0 0
      %1883 = vmatmul.mubr.bf16.gmra.mrb[0].mxu0 %v1724
      %v1884 = vpop.f32.mrb[0].mxu0
      %v1885 = vadd.f32 0.0, %v1884
      %v1886 = vpop.f32.mrb[0].mxu0
      %v1887 = vpop.f32.mrb[0].mxu0
      %v1888 = vadd.f32 0.0, %v1887
      %v1889 = vpop.f32.mrb[0].mxu0
      %1890 = vdwg.mxu0
      %v1891 = vld [vmem:[%s4] sm:$0x1]
      %v1893 = vlaneseq
      %v1894 = vshrl.u32 %v1893, 7
      %v1895 = vsub.s32 0, %v1894
      %v1896 = vrot.slane %v1891, %v1895
      %v1898 = vmul.f32 %v1765, %v1896
      %v1899 = vmul.f32 %v1768, %v1896
      %v1900 = vmul.f32 %v1773, %v1896
      %v1901 = vmul.f32 %v1776, %v1896
      %v1902 = vmul.f32 %v1781, %v1896
      %v1903 = vmul.f32 %v1784, %v1896
      %v1904 = vmul.f32 %v1789, %v1896
      %v1905 = vmul.f32 %v1792, %v1896
      %v1906 = vmul.f32 %v1797, %v1896
      %v1907 = vmul.f32 %v1800, %v1896
      %v1908 = vmul.f32 %v1805, %v1896
      %v1909 = vmul.f32 %v1808, %v1896
      %v1910 = vmul.f32 %v1813, %v1896
      %v1911 = vmul.f32 %v1816, %v1896
      %v1912 = vmul.f32 %v1821, %v1896
      %v1913 = vmul.f32 %v1824, %v1896
      %v1914 = vmul.f32 %v1829, %v1896
      %v1915 = vmul.f32 %v1832, %v1896
      %v1916 = vmul.f32 %v1837, %v1896
      %v1917 = vmul.f32 %v1840, %v1896
      %v1918 = vmul.f32 %v1845, %v1896
      %v1919 = vmul.f32 %v1848, %v1896
      %v1920 = vmul.f32 %v1853, %v1896
      %v1921 = vmul.f32 %v1856, %v1896
      %v1922 = vmul.f32 %v1861, %v1896
      %v1923 = vmul.f32 %v1864, %v1896
      %v1924 = vmul.f32 %v1869, %v1896
      %v1925 = vmul.f32 %v1872, %v1896
      %v1926 = vmul.f32 %v1877, %v1896
      %v1927 = vmul.f32 %v1880, %v1896
      %v1928 = vmul.f32 %v1885, %v1896
      %v1929 = vmul.f32 %v1888, %v1896
      %v1930 = vld [vmem:[%s5] sm:$0x1]
      %v1932 = vlaneseq
      %v1933 = vshrl.u32 %v1932, 7
      %v1934 = vsub.s32 0, %v1933
      %v1935 = vrot.slane %v1930, %v1934
      %v1937 = vadd.f32 %v1898, %v1935
      %v1938 = vadd.f32 %v1899, %v1935
      %v1939 = vadd.f32 %v1900, %v1935
      %v1940 = vadd.f32 %v1901, %v1935
      %v1941 = vadd.f32 %v1902, %v1935
      %v1942 = vadd.f32 %v1903, %v1935
      %v1943 = vadd.f32 %v1904, %v1935
      %v1944 = vadd.f32 %v1905, %v1935
      %v1945 = vadd.f32 %v1906, %v1935
      %v1946 = vadd.f32 %v1907, %v1935
      %v1947 = vadd.f32 %v1908, %v1935
      %v1948 = vadd.f32 %v1909, %v1935
      %v1949 = vadd.f32 %v1910, %v1935
      %v1950 = vadd.f32 %v1911, %v1935
      %v1951 = vadd.f32 %v1912, %v1935
      %v1952 = vadd.f32 %v1913, %v1935
      %v1953 = vadd.f32 %v1914, %v1935
      %v1954 = vadd.f32 %v1915, %v1935
      %v1955 = vadd.f32 %v1916, %v1935
      %v1956 = vadd.f32 %v1917, %v1935
      %v1957 = vadd.f32 %v1918, %v1935
      %v1958 = vadd.f32 %v1919, %v1935
      %v1959 = vadd.f32 %v1920, %v1935
      %v1960 = vadd.f32 %v1921, %v1935
      %v1961 = vadd.f32 %v1922, %v1935
      %v1962 = vadd.f32 %v1923, %v1935
      %v1963 = vadd.f32 %v1924, %v1935
      %v1964 = vadd.f32 %v1925, %v1935
      %v1965 = vadd.f32 %v1926, %v1935
      %v1966 = vadd.f32 %v1927, %v1935
      %v1967 = vadd.f32 %v1928, %v1935
      %v1968 = vadd.f32 %v1929, %v1935
      %v1969 = vmax.f32 %v1937, 0.0
      %v1970 = vmax.f32 %v1938, 0.0
      %v1971 = vmax.f32 %v1939, 0.0
      %v1972 = vmax.f32 %v1940, 0.0
      %v1973 = vmax.f32 %v1941, 0.0
      %v1974 = vmax.f32 %v1942, 0.0
      %v1975 = vmax.f32 %v1943, 0.0
      %v1976 = vmax.f32 %v1944, 0.0
      %v1977 = vmax.f32 %v1945, 0.0
      %v1978 = vmax.f32 %v1946, 0.0
      %v1979 = vmax.f32 %v1947, 0.0
      %v1980 = vmax.f32 %v1948, 0.0
      %v1981 = vmax.f32 %v1949, 0.0
      %v1982 = vmax.f32 %v1950, 0.0
      %v1983 = vmax.f32 %v1951, 0.0
      %v1984 = vmax.f32 %v1952, 0.0
      %v1985 = vmax.f32 %v1953, 0.0
      %v1986 = vmax.f32 %v1954, 0.0
      %v1987 = vmax.f32 %v1955, 0.0
      %v1988 = vmax.f32 %v1956, 0.0
      %v1989 = vmax.f32 %v1957, 0.0
      %v1990 = vmax.f32 %v1958, 0.0
      %v1991 = vmax.f32 %v1959, 0.0
      %v1992 = vmax.f32 %v1960, 0.0
      %v1993 = vmax.f32 %v1961, 0.0
      %v1994 = vmax.f32 %v1962, 0.0
      %v1995 = vmax.f32 %v1963, 0.0
      %v1996 = vmax.f32 %v1964, 0.0
      %v1997 = vmax.f32 %v1965, 0.0
      %v1998 = vmax.f32 %v1966, 0.0
      %v1999 = vmax.f32 %v1967, 0.0
      %v2000 = vmax.f32 %v1968, 0.0
      %v2001 = vld [vmem:[#allocation2] sm:$0x1]
      %v2002 = vsel %vm1426, %v1969, 0.0
      %v2003 = vsel %vm1426, %v1970, 0.0
      %v2004 = vadd.f32 %v2002, %v2003
      %v2005 = vsel %vm1426, %v1971, 0.0
      %v2006 = vadd.f32 %v2004, %v2005
      %v2007 = vsel %vm1426, %v1972, 0.0
      %v2008 = vadd.f32 %v2006, %v2007
      %v2009 = vsel %vm1426, %v1973, 0.0
      %v2010 = vadd.f32 %v2008, %v2009
      %v2011 = vsel %vm1426, %v1974, 0.0
      %v2012 = vadd.f32 %v2010, %v2011
      %v2013 = vsel %vm1426, %v1975, 0.0
      %v2014 = vadd.f32 %v2012, %v2013
      %v2015 = vsel %vm1426, %v1976, 0.0
      %v2016 = vadd.f32 %v2014, %v2015
      %v2017 = vsel %vm1426, %v1977, 0.0
      %v2018 = vadd.f32 %v2016, %v2017
      %v2019 = vsel %vm1426, %v1978, 0.0
      %v2020 = vadd.f32 %v2018, %v2019
      %v2021 = vsel %vm1426, %v1979, 0.0
      %v2022 = vadd.f32 %v2020, %v2021
      %v2023 = vsel %vm1426, %v1980, 0.0
      %v2024 = vadd.f32 %v2022, %v2023
      %v2025 = vsel %vm1426, %v1981, 0.0
      %v2026 = vadd.f32 %v2024, %v2025
      %v2027 = vsel %vm1426, %v1982, 0.0
      %v2028 = vadd.f32 %v2026, %v2027
      %v2029 = vsel %vm1426, %v1983, 0.0
      %v2030 = vadd.f32 %v2028, %v2029
      %v2031 = vsel %vm1426, %v1984, 0.0
      %v2032 = vadd.f32 %v2030, %v2031
      %v2033 = vsel %vm1426, %v1985, 0.0
      %v2034 = vadd.f32 %v2032, %v2033
      %v2035 = vsel %vm1426, %v1986, 0.0
      %v2036 = vadd.f32 %v2034, %v2035
      %v2037 = vsel %vm1426, %v1987, 0.0
      %v2038 = vadd.f32 %v2036, %v2037
      %v2039 = vsel %vm1426, %v1988, 0.0
      %v2040 = vadd.f32 %v2038, %v2039
      %v2041 = vsel %vm1426, %v1989, 0.0
      %v2042 = vadd.f32 %v2040, %v2041
      %v2043 = vsel %vm1426, %v1990, 0.0
      %v2044 = vadd.f32 %v2042, %v2043
      %v2045 = vsel %vm1426, %v1991, 0.0
      %v2046 = vadd.f32 %v2044, %v2045
      %v2047 = vsel %vm1426, %v1992, 0.0
      %v2048 = vadd.f32 %v2046, %v2047
      %v2049 = vsel %vm1426, %v1993, 0.0
      %v2050 = vadd.f32 %v2048, %v2049
      %v2051 = vsel %vm1426, %v1994, 0.0
      %v2052 = vadd.f32 %v2050, %v2051
      %v2053 = vsel %vm1426, %v1995, 0.0
      %v2054 = vadd.f32 %v2052, %v2053
      %v2055 = vsel %vm1426, %v1996, 0.0
      %v2056 = vadd.f32 %v2054, %v2055
      %v2057 = vsel %vm1426, %v1997, 0.0
      %v2058 = vadd.f32 %v2056, %v2057
      %v2059 = vsel %vm1426, %v1998, 0.0
      %v2060 = vadd.f32 %v2058, %v2059
      %v2061 = vsel %vm1426, %v1999, 0.0
      %v2062 = vadd.f32 %v2060, %v2061
      %v2063 = vsel %vm1426, %v2000, 0.0
      %v2064 = vadd.f32 %v2062, %v2063
      %v2065 = vrot.slane %v2064, 4
      %v2066 = vadd.f32 %v2064, %v2065
      %v2067 = vrot.slane %v2066, 2
      %v2068 = vadd.f32 %v2066, %v2067
      %v2069 = vrot.slane %v2068, 1
      %v2070 = vadd.f32 %v2068, %v2069
      %v2071 = vadd.f32 %v2001, %v2070
      %vm2072 = vcmask 122880
      %2073 = vst.msk [vmem:[#allocation2] sm:$0x1] %vm2072, %v2071
      %s2074 = smul.u32 %s25, 256
      %2075 = vxpose.xlu0.b32.start [1/16] %v1969, 128
      %2076 = vxpose.xlu0.b32.cont [2/16] %v1970, 128
      %2077 = vxpose.xlu0.b32.cont [3/16] %v1971, 128
      %2078 = vxpose.xlu0.b32.cont [4/16] %v1972, 128
      %2079 = vxpose.xlu0.b32.cont [5/16] %v1973, 128
      %2080 = vxpose.xlu0.b32.cont [6/16] %v1974, 128
      %2081 = vxpose.xlu0.b32.cont [7/16] %v1975, 128
      %2082 = vxpose.xlu0.b32.cont [8/16] %v1976, 128
      %2083 = vxpose.xlu0.b32.cont [9/16] %v1977, 128
      %2084 = vxpose.xlu0.b32.cont [10/16] %v1978, 128
      %2085 = vxpose.xlu0.b32.cont [11/16] %v1979, 128
      %2086 = vxpose.xlu0.b32.cont [12/16] %v1980, 128
      %2087 = vxpose.xlu0.b32.cont [13/16] %v1981, 128
      %2088 = vxpose.xlu0.b32.cont [14/16] %v1982, 128
      %2089 = vxpose.xlu0.b32.cont [15/16] %v1983, 128
      %2090 = vxpose.xlu0.b32.end [16/16] %v1984, 128
      %v2091 = vpop.trf.xlu0
      %v2092 = vpop.trf.xlu0
      %v2093 = vpop.trf.xlu0
      %v2094 = vpop.trf.xlu0
      %v2095 = vpop.trf.xlu0
      %v2096 = vpop.trf.xlu0
      %v2097 = vpop.trf.xlu0
      %v2098 = vpop.trf.xlu0
      %v2099 = vpop.trf.xlu0
      %v2100 = vpop.trf.xlu0
      %v2101 = vpop.trf.xlu0
      %v2102 = vpop.trf.xlu0
      %v2103 = vpop.trf.xlu0
      %v2104 = vpop.trf.xlu0
      %v2105 = vpop.trf.xlu0
      %v2106 = vpop.trf.xlu0
      %2107 = vxpose.xlu0.b32.start [1/16] %v1985, 128
      %2108 = vxpose.xlu0.b32.cont [2/16] %v1986, 128
      %2109 = vxpose.xlu0.b32.cont [3/16] %v1987, 128
      %2110 = vxpose.xlu0.b32.cont [4/16] %v1988, 128
      %2111 = vxpose.xlu0.b32.cont [5/16] %v1989, 128
      %2112 = vxpose.xlu0.b32.cont [6/16] %v1990, 128
      %2113 = vxpose.xlu0.b32.cont [7/16] %v1991, 128
      %2114 = vxpose.xlu0.b32.cont [8/16] %v1992, 128
      %2115 = vxpose.xlu0.b32.cont [9/16] %v1993, 128
      %2116 = vxpose.xlu0.b32.cont [10/16] %v1994, 128
      %2117 = vxpose.xlu0.b32.cont [11/16] %v1995, 128
      %2118 = vxpose.xlu0.b32.cont [12/16] %v1996, 128
      %2119 = vxpose.xlu0.b32.cont [13/16] %v1997, 128
      %2120 = vxpose.xlu0.b32.cont [14/16] %v1998, 128
      %2121 = vxpose.xlu0.b32.cont [15/16] %v1999, 128
      %2122 = vxpose.xlu0.b32.end [16/16] %v2000, 128
      %v2123 = vpop.trf.xlu0
      %v2124 = vpop.trf.xlu0
      %v2125 = vpop.trf.xlu0
      %v2126 = vpop.trf.xlu0
      %v2127 = vpop.trf.xlu0
      %v2128 = vpop.trf.xlu0
      %v2129 = vpop.trf.xlu0
      %v2130 = vpop.trf.xlu0
      %v2131 = vpop.trf.xlu0
      %v2132 = vpop.trf.xlu0
      %v2133 = vpop.trf.xlu0
      %v2134 = vpop.trf.xlu0
      %v2135 = vpop.trf.xlu0
      %v2136 = vpop.trf.xlu0
      %v2137 = vpop.trf.xlu0
      %v2138 = vpop.trf.xlu0
      %s2139 = sshra.s32 %s2074, 7
      %s2140 = sand.u32 %s2074, 127
      %s2141 = smul.addr %s2139, 8
      %s2142 = scalar_lea.vmem %s487, %s2141
      %2143 = vst [vmem:[%s2142] sm:$0xff] %v2091
      %2144 = vst [vmem:[%s2142 + $0x8] sm:$0xff] %v2123
      %2145 = vst [vmem:[%s2142 + $0x10] sm:$0xff] %v2092
      %2146 = vst [vmem:[%s2142 + $0x18] sm:$0xff] %v2124
      // Predicated region
      $region61: #{attention_refinement.1} parent=55 // pred_check
        %p2147 = pneg %p489
      $region62: #{attention_refinement.1} parent=55 // pred_check_branch
        %2149 = sbr.rel (%p2147) target = $region64
      $region63: #{attention_refinement.1} parent=55 // pred_region
        %v2150 = vld [vmem:[%s6] sm:$0xff]
        %v2151 = vld [vmem:[%s6 + $0x8] sm:$0xff]
        %v2152 = vld [vmem:[#allocation2] sm:$0x1]
        %v2154 = vlaneseq
        %v2155 = vshrl.u32 %v2154, 7
        %v2156 = vsub.s32 0, %v2155
        %v2157 = vrot.slane %v2152, %v2156
        %v2159 = vmul.f32 %v2150, %v2157
        %v2160 = vmul.f32 %v2151, %v2157
        %v2161 = vsel %vm1426, %v2159, 0.0
        %2162 = vadd.xlane.f32.xlu0 %v2161
        %v2163 = vpop.xlane.xlu0 %2162
        %v2164 = vsel %vm1426, %v2160, 0.0
        %2165 = vadd.xlane.f32.xlu0 %v2164
        %v2166 = vpop.xlane.xlu0 %2165
        %v2167 = vld [vmem:[%s7] sm:$0xff]
        %v2168 = vld [vmem:[%s7 + $0x8] sm:$0xff]
        %v2169 = vmul.f32 %v2163, %v2167
        %v2170 = vmul.f32 %v2166, %v2168
        %v2171 = vld [vmem:[%s8] sm:$0xff]
        %v2172 = vld [vmem:[%s8 + $0x8] sm:$0xff]
        %v2173 = vadd.f32 %v2169, %v2171
        %v2174 = vadd.f32 %v2170, %v2172
        %v2175 = vsub.f32 0.0, %v2173
        %v2176 = vsub.f32 0.0, %v2174
        %v2177 = vmul.f32 %v2175, 1.442695
        %v2178 = vpow.pop %v2177
        %v2179 = vmul.f32 %v2176, 1.442695
        %v2180 = vpow.pop %v2179
        %v2181 = vadd.f32 %v2178, 1.0
        %v2182 = vadd.f32 %v2180, 1.0
        %v2183 = vrcp.pop %v2181
        %v2184 = vmul.f32 1.0, %v2183
        %v2185 = vrcp.pop %v2182
        %v2186 = vmul.f32 1.0, %v2185
        %v2187 = vld [vmem:[%s487] sm:$0xff]
        %v2188 = vld [vmem:[%s487 + $0x8] sm:$0xff]
        %v2189 = vld [vmem:[%s487 + $0x10] sm:$0xff]
        %v2190 = vld [vmem:[%s487 + $0x18] sm:$0xff]
        %2192 = vset.pattern.permute.xlu0 0
        %2193 = vperm.xlu0 %2192, %v2184
        %v2194 = vpop.permute.xlu0 %2193
        %2197 = vset.pattern.permute.xlu0 0
        %2198 = vperm.xlu0 %2197, %v2186
        %v2199 = vpop.permute.xlu0 %2198
        %v2201 = vmul.f32 %v2187, %v2194
        %v2202 = vmul.f32 %v2188, %v2194
        %v2203 = vmul.f32 %v2189, %v2199
        %v2204 = vmul.f32 %v2190, %v2199
        %2205 = vst [vmem:[%s487] sm:$0xff] %v2201
        %2206 = vst [vmem:[%s487 + $0x8] sm:$0xff] %v2202
        %2207 = vst [vmem:[%s487 + $0x10] sm:$0xff] %v2203
        %2208 = vst [vmem:[%s487 + $0x18] sm:$0xff] %v2204
      $region64: #{attention_refinement.1} parent=55 // pred_fallthru
        _
      %p2209 = scmp.lt.s32.totalorder %s24, 1
      %s2210 = scalar_select %p2209, %s24, 1
      %s2211 = smul.addr %s2210, 4
      %s2212 = smul.addr %s2211, 8
      %s2213 = scalar_lea.vmem %s9, %s2212
      // Predicated region
      $region65: #{attention_refinement.1} parent=55 // pred_check
        %p2214 = pneg %p276
      $region66: #{attention_refinement.1} parent=55 // pred_check_branch
        %2216 = sbr.rel (%p2214) target = $region68
      $region67: #{attention_refinement.1} parent=55 // pred_region
        _
      $region68: #{attention_refinement.1} parent=55 // pred_fallthru
        _
    $region56: #{attention_refinement.1} parent=5 // pred_fallthru
      _
    %p2217 = scmp.le.s32.totalorder 2, %s15
    // Predicated region
    $region69: #{attention_refinement.1} parent=5 // pred_check
      %p2218 = pneg %p2217
    $region70: #{attention_refinement.1} parent=5 // pred_check_branch
      %2220 = sbr.rel (%p2218) target = $region72
    $region71: #{attention_refinement.1} parent=5 // pred_region
      %s2221 = ssub.s32 %s15, 2
      // Predicated region
      $region73: #{attention_refinement.1} parent=71 // pred_check
        %p2222 = pneg %p282
      $region74: #{attention_refinement.1} parent=71 // pred_check_branch
        %2224 = sbr.rel (%p2222) target = $region76
      $region75: #{attention_refinement.1} parent=71 // pred_region
        %p2225 = scmp.lt.s32.totalorder %s26, 1
        %s2226 = scalar_select %p2225, %s26, 1
        %s2227 = smul.addr %s2226, 4
        %s2228 = smul.addr %s2227, 8
        %s2229 = scalar_lea.vmem %s9, %s2228
      $region76: #{attention_refinement.1} parent=71 // pred_fallthru
        _
    $region72: #{attention_refinement.1} parent=5 // pred_fallthru
      _
  $region6: #{attention_refinement.1} parent=0 // loop_footer
    %s19 = sadd.s32 1, %s15
  $region7: #{attention_refinement.1} parent=0 // loop_footer_branch
    %14 = sbr.rel target = $region3
  $region8: #{attention_refinement.1} parent=0 // loop_exit
    _

</llo_original>
